<compile_context>
chip_gen: v6e
topology: v6e:2x2x1
jax: 0.10.0
libtpu: 0.0.40
codegen_flags: <defaults>
</compile_context>

<pallas_src>
import functools

import jax
import jax.numpy as jnp
from jax.experimental import pallas as pl
from jax.experimental.pallas import tpu as pltpu

_EPS = 1e-5
_VMEM_LIMIT = 32 * 1024 * 1024   # safe scoped-VMEM budget on v5e/v6e/v7x
_MAX_TILE_ROWS = 1024            # review: raise tile cap well above 512


def _round_up(x, m):
    return (x + m - 1) // m * m


def _row_tile(rows):
    """Row tile size: at least 2 tiles (v7x dual TC + pipelining), tiles up to 1024
    rows, rows split as evenly as possible so tail padding stays small."""
    n_tiles = max(2, pl.cdiv(rows, _MAX_TILE_ROWS))
    return max(8, _round_up(pl.cdiv(rows, n_tiles), 8))


# ----------------------------- Pallas kernels --------------------------------

def _conv_rows_kernel(cols_ref, w_ref, b_ref, y_ref, st_ref, *, tm, rows_valid):
    """Row-tiled im2col matmul (conv1): y = cols @ W + b, plus per-tile partial
    per-channel sum / sum-of-squares for BatchNorm (rows past rows_valid masked)."""
    y = jnp.dot(cols_ref[...], w_ref[...],
                preferred_element_type=jnp.float32) + b_ref[...]        # (tm, Cout) f32
    y_bf = y.astype(jnp.bfloat16)
    y_ref[...] = y_bf                                                    # true-width store

    # BN partial stats on the bf16-rounded values actually stored (self-consistent).
    row0 = pl.program_id(0) * tm
    rid = jax.lax.broadcasted_iota(jnp.int32, (tm, 1), 0) + row0
    yv = jnp.where(rid < rows_valid, y_bf.astype(jnp.float32), 0.0)
    s = jnp.sum(yv, axis=0, keepdims=True)                               # (1, Cout)
    ss = jnp.sum(yv * yv, axis=0, keepdims=True)                         # (1, Cout)
    sub = jax.lax.broadcasted_iota(jnp.int32, (8, y.shape[1]), 0)
    st_ref[...] = jnp.where(sub == 0, s, ss)[None]                       # sublane0=sum, 1..7=sumsq


def _conv2_image_kernel(h1p_ref, s1_ref, f1_ref, w2_ref, b2_ref, y_ref, st_ref,
                        *, ho, wo, cin):
    """Per-image halo-tile conv2: BN1-affine + ReLU applied once per element in VMEM,
    padding ring re-zeroed, conv done as 9 accumulated (M, Cin) @ (Cin, Cout) matmuls
    on patches sliced in VMEM (no im2col in HBM).  Also emits BN2 partial stats."""
    x = h1p_ref[0].astype(jnp.float32)                                   # (Hp, Wp, C)
    a = jnp.maximum(x * s1_ref[...] + f1_ref[...], 0.0)                  # BN1 + ReLU, once/elem
    hi = jax.lax.broadcasted_iota(jnp.int32, a.shape, 0)
    wi = jax.lax.broadcasted_iota(jnp.int32, a.shape, 1)
    inside = (hi >= 1) & (hi <= ho) & (wi >= 1) & (wi <= wo)             # conv2 zero padding
    a = jnp.where(inside, a, 0.0).astype(jnp.bfloat16)

    acc = None
    for t, (ky, kx) in enumerate((ky, kx) for ky in range(3) for kx in range(3)):
        lhs = a[ky:ky + ho, kx:kx + wo, :].reshape(ho * wo, cin)         # patch in VMEM
        part = jnp.dot(lhs, w2_ref[t], preferred_element_type=jnp.float32)
        acc = part if acc is None else acc + part
    y = acc + b2_ref[...]                                                # (M, Cout) f32
    y_bf = y.astype(jnp.bfloat16)
    y_ref[...] = y_bf[None]

    yv = y_bf.astype(jnp.float32)
    s = jnp.sum(yv, axis=0, keepdims=True)
    ss = jnp.sum(yv * yv, axis=0, keepdims=True)
    sub = jax.lax.broadcasted_iota(jnp.int32, (8, yv.shape[1]), 0)
    st_ref[...] = jnp.where(sub == 0, s, ss)[None]


def _bn_relu_kernel(y_ref, s_ref, f_ref, o_ref):
    """out = max(y * scale + shift, 0) on a row tile, true channel width only."""
    o_ref[...] = jnp.maximum(
        y_ref[...].astype(jnp.float32) * s_ref[...] + f_ref[...], 0.0)


# ----------------------------- pallas_call wrappers ---------------------------

def _conv_rows(cols, w_mat, bias, rows_valid, tm):
    rows_pad, k = cols.shape
    cout = w_mat.shape[1]
    grid = rows_pad // tm
    kern = functools.partial(_conv_rows_kernel, tm=tm, rows_valid=rows_valid)
    return pl.pallas_call(
        kern,
        grid=(grid,),
        in_specs=[pl.BlockSpec((tm, k), lambda i: (i, 0)),         # im2col row tile (true K)
                  pl.BlockSpec((k, cout), lambda i: (0, 0)),       # weights, VMEM-resident
                  pl.BlockSpec((1, cout), lambda i: (0, 0))],      # bias
        out_specs=(pl.BlockSpec((tm, cout), lambda i: (i, 0)),     # raw (pre-BN) conv output
                   pl.BlockSpec((1, 8, cout), lambda i: (i, 0, 0))),
        out_shape=(jax.ShapeDtypeStruct((rows_pad, cout), jnp.bfloat16),
                   jax.ShapeDtypeStruct((grid, 8, cout), jnp.float32)),
        compiler_params=pltpu.CompilerParams(
            dimension_semantics=("parallel",), vmem_limit_bytes=_VMEM_LIMIT),
    )(cols, w_mat, bias)


def _conv2_per_image(h1p, s1, f1, w2, b2, ho, wo):
    n, hp, wp, cin = h1p.shape
    cout = w2.shape[2]
    m = ho * wo
    kern = functools.partial(_conv2_image_kernel, ho=ho, wo=wo, cin=cin)
    return pl.pallas_call(
        kern,
        grid=(n,),
        in_specs=[pl.BlockSpec((1, hp, wp, cin), lambda i: (i, 0, 0, 0)),  # halo image tile
                  pl.BlockSpec((1, 1, cin), lambda i: (0, 0, 0)),          # BN1 scale
                  pl.BlockSpec((1, 1, cin), lambda i: (0, 0, 0)),          # BN1 shift
                  pl.BlockSpec((9, cin, cout), lambda i: (0, 0, 0)),       # 9 tap weights
                  pl.BlockSpec((1, cout), lambda i: (0, 0))],              # bias
        out_specs=(pl.BlockSpec((1, m, cout), lambda i: (i, 0, 0)),
                   pl.BlockSpec((1, 8, cout), lambda i: (i, 0, 0))),
        out_shape=(jax.ShapeDtypeStruct((n, m, cout), jnp.bfloat16),
                   jax.ShapeDtypeStruct((n, 8, cout), jnp.float32)),
        compiler_params=pltpu.CompilerParams(
            dimension_semantics=("parallel",), vmem_limit_bytes=_VMEM_LIMIT),
    )(h1p, s1, f1, w2, b2)


def _bn_relu(y, scale, shift, tm):
    rows_pad, c = y.shape
    grid = rows_pad // tm
    return pl.pallas_call(
        _bn_relu_kernel,
        grid=(grid,),
        in_specs=[pl.BlockSpec((tm, c), lambda i: (i, 0)),
                  pl.BlockSpec((1, c), lambda i: (0, 0)),
                  pl.BlockSpec((1, c), lambda i: (0, 0))],
        out_specs=pl.BlockSpec((tm, c), lambda i: (i, 0)),
        out_shape=jax.ShapeDtypeStruct((rows_pad, c), jnp.float32),
        compiler_params=pltpu.CompilerParams(
            dimension_semantics=("parallel",), vmem_limit_bytes=_VMEM_LIMIT),
    )(y, scale, shift)


# ------------------------------ JAX glue --------------------------------------

def _im2col(x_nhwc, stride):
    """3x3 pad=1 patch extraction -> (N*Ho*Wo, 9*C), true K (no lane padding).
    Used only for conv1 (stride 2: expansion is modest, ~2.25x of the input)."""
    n, h, w, c = x_nhwc.shape
    xp = jnp.pad(x_nhwc, ((0, 0), (1, 1), (1, 1), (0, 0)))
    ho = (h + 2 - 3) // stride + 1
    wo = (w + 2 - 3) // stride + 1
    patches = [xp[:, ky:ky + stride * ho:stride, kx:kx + stride * wo:stride, :]
               for ky in range(3) for kx in range(3)]
    cols = jnp.stack(patches, axis=3)                 # (N, Ho, Wo, 9, C)
    return cols.reshape(n * ho * wo, 9 * c), ho, wo


def _prep_w_flat(w, b):
    """PyTorch (Cout, Cin, 3, 3) -> bf16 (9*Cin, Cout) matmul weight + (1, Cout) bias."""
    cout, cin = w.shape[0], w.shape[1]
    w_mat = jnp.transpose(w, (2, 3, 1, 0)).reshape(9 * cin, cout).astype(jnp.bfloat16)
    return w_mat, b.astype(jnp.float32).reshape(1, cout)


def _prep_w_taps(w, b):
    """PyTorch (Cout, Cin, 3, 3) -> bf16 (9, Cin, Cout) per-tap weights + (1, Cout) bias."""
    cout, cin = w.shape[0], w.shape[1]
    w_taps = jnp.transpose(w, (2, 3, 1, 0)).reshape(9, cin, cout).astype(jnp.bfloat16)
    return w_taps, b.astype(jnp.float32).reshape(1, cout)


def _bn_fold(stats, count, gamma, beta):
    """Training-mode batch stats (biased variance) -> per-channel scale/shift (f32)."""
    s = jnp.sum(stats[:, 0, :], axis=0)
    ss = jnp.sum(stats[:, 1, :], axis=0)
    mean = s / count
    var = jnp.maximum(ss / count - mean * mean, 0.0)   # clamp avoids NaN from cancellation
    scale = gamma.astype(jnp.float32) / jnp.sqrt(var + _EPS)
    shift = beta.astype(jnp.float32) - mean * scale
    return scale, shift                                # (Cout,)


def _downblock_forward_impl(x_nchw, params):
    x = jnp.transpose(x_nchw, (0, 2, 3, 1)).astype(jnp.bfloat16)   # NCHW -> NHWC, bf16
    n = x.shape[0]
    cout = params["w1"].shape[0]

    # ---- conv1: 3x3, stride 2, pad 1 (im2col rows @ weights, row-tiled) ----
    cols1, ho1, wo1 = _im2col(x, stride=2)
    rows1 = n * ho1 * wo1
    tm1 = _row_tile(rows1)
    rows1p = _round_up(rows1, tm1)
    cols1 = jnp.pad(cols1, ((0, rows1p - rows1), (0, 0)))
    w1, b1 = _prep_w_flat(params["w1"], params["b1"])
    y1, st1 = _conv_rows(cols1, w1, b1, rows1, tm1)

    scale1, shift1 = _bn_fold(st1, jnp.float32(rows1), params["g1"], params["be1"])

    # ---- conv2: halo-tile kernel; BN1+ReLU fused once per element in VMEM ----
    h1p = jnp.pad(y1[:rows1].reshape(n, ho1, wo1, cout),
                  ((0, 0), (1, 1), (1, 1), (0, 0)))                # cheap spatial pad only
    w2, b2 = _prep_w_taps(params["w2"], params["b2"])
    y2, st2 = _conv2_per_image(h1p,
                               scale1.reshape(1, 1, cout),
                               shift1.reshape(1, 1, cout),
                               w2, b2, ho1, wo1)
    rows2 = n * ho1 * wo1
    scale2, shift2 = _bn_fold(st2, jnp.float32(rows2), params["g2"], params["be2"])

    # ---- final BN + ReLU (row-tiled, true channel width stores) ----
    y2f = y2.reshape(rows2, cout)
    tm3 = _row_tile(rows2)
    rows2p = _round_up(rows2, tm3)
    y2f = jnp.pad(y2f, ((0, rows2p - rows2), (0, 0)))
    out = _bn_relu(y2f, scale2.reshape(1, cout), shift2.reshape(1, cout), tm3)
    out = out[:rows2].reshape(n, ho1, wo1, cout)
    return jnp.transpose(out, (0, 3, 1, 2))                         # back to NCHW


downblock_forward = jax.jit(_downblock_forward_impl)


def init_downblock_params(key, in_channel, out_channel):
    """Deterministic synthetic params matching nn.Conv2d / nn.BatchNorm2d shapes."""
    k1, k2, k3, k4 = jax.random.split(key, 4)
    fan1 = in_channel * 9
    fan2 = out_channel * 9
    return {
        "w1": jax.random.uniform(k1, (out_channel, in_channel, 3, 3), jnp.float32,
                                 -1.0, 1.0) / jnp.sqrt(jnp.float32(fan1)),
        "b1": jax.random.uniform(k2, (out_channel,), jnp.float32,
                                 -1.0, 1.0) / jnp.sqrt(jnp.float32(fan1)),
        "g1": jnp.ones((out_channel,), jnp.float32),
        "be1": jnp.zeros((out_channel,), jnp.float32),
        "w2": jax.random.uniform(k3, (out_channel, out_channel, 3, 3), jnp.float32,
                                 -1.0, 1.0) / jnp.sqrt(jnp.float32(fan2)),
        "b2": jax.random.uniform(k4, (out_channel,), jnp.float32,
                                 -1.0, 1.0) / jnp.sqrt(jnp.float32(fan2)),
        "g2": jnp.ones((out_channel,), jnp.float32),
        "be2": jnp.zeros((out_channel,), jnp.float32),
    }


# --------------------------------- main ---------------------------------------

if __name__ == "__main__":
    key = jax.random.PRNGKey(0)
    k_x, k_p = jax.random.split(key)

    in_channel, out_channel = 4, 8
    x = jax.random.normal(k_x, (2, in_channel, 16, 16), dtype=jnp.float32)  # NCHW
    params = init_downblock_params(k_p, in_channel, out_channel)

    out = downblock_forward(x, params)
    out = jax.block_until_ready(out)

    assert out.shape == (2, out_channel, 8, 8), out.shape
    assert jnp.all(jnp.isfinite(out)) and jnp.all(out >= 0.0)
    print("KERNEL_OK")
</pallas_src>

<mosaic_0001>
module attributes {stable_mosaic.version = 11 : i64} {
  func.func @_conv_rows_kernel(%arg0: i32, %arg1: memref<64x36xbf16, #tpu.memory_space<vmem>>, %arg2: memref<36x8xbf16, #tpu.memory_space<vmem>>, %arg3: memref<1x8xf32, #tpu.memory_space<vmem>>, %arg4: memref<64x8xbf16, #tpu.memory_space<vmem>>, %arg5: memref<1x8x8xf32, #tpu.memory_space<vmem>>) attributes {dimension_semantics = [#tpu.dimension_semantics<parallel>], iteration_bounds = array<i64: 2>, scalar_prefetch = 0 : i64, scratch_operands = 0 : i64, tpu.core_type = #tpu.core_type<tc>, window_params = [{transform_indices = @transform_0, window_bounds = array<i64: 64, 36>}, {pipeline_mode = #tpu.pipeline_mode<synchronous>, transform_indices = @transform_1, window_bounds = array<i64: 36, 8>}, {pipeline_mode = #tpu.pipeline_mode<synchronous>, transform_indices = @transform_2, window_bounds = array<i64: 1, 8>}, {transform_indices = @transform_3, window_bounds = array<i64: 64, 8>}, {transform_indices = @transform_4, window_bounds = array<i64: 1, 8, 8>}]} {
    %c0 = arith.constant 0 : index
    %c0_0 = arith.constant 0 : index
    %0 = vector.load %arg1[%c0, %c0_0] : memref<64x36xbf16, #tpu.memory_space<vmem>>, vector<64x36xbf16>
    %c0_1 = arith.constant 0 : index
    %c0_2 = arith.constant 0 : index
    %1 = vector.load %arg2[%c0_1, %c0_2] : memref<36x8xbf16, #tpu.memory_space<vmem>>, vector<36x8xbf16>
    %cst = arith.constant dense<0.000000e+00> : vector<64x8xf32>
    %2 = tpu.matmul %0, %1, %cst {dimension_numbers = #tpu.dot_dimension_numbers<[1], [0], [0], [1], [0, 0, 1, 1], [], []>} : vector<64x36xbf16>, vector<36x8xbf16>, vector<64x8xf32> -> vector<64x8xf32>
    %c0_3 = arith.constant 0 : index
    %c0_4 = arith.constant 0 : index
    %3 = vector.load %arg3[%c0_3, %c0_4] : memref<1x8xf32, #tpu.memory_space<vmem>>, vector<1x8xf32>
    %4 = vector.broadcast %3 : vector<1x8xf32> to vector<64x8xf32>
    %5 = arith.addf %2, %4 : vector<64x8xf32>
    %6 = arith.truncf %5 : vector<64x8xf32> to vector<64x8xbf16>
    %c0_5 = arith.constant 0 : index
    %c0_6 = arith.constant 0 : index
    %7 = vector.load %arg4[%c0_5, %c0_6] : memref<64x8xbf16, #tpu.memory_space<vmem>>, vector<64x8xbf16>
    tpu.vector_store %arg4[%c0_5, %c0_6], %6 {strides = array<i32>} : memref<64x8xbf16, #tpu.memory_space<vmem>>, vector<64x8xbf16>,
    %c64_i32 = arith.constant 64 : i32
    %8 = arith.muli %arg0, %c64_i32 : i32
    %9 = tpu.iota {dimensions = array<i32: 0>} : vector<64x1xi32>
    %10 = vector.broadcast %8 : i32 to vector<64x1xi32>
    %11 = arith.addi %9, %10 : vector<64x1xi32>
    %c128_i32 = arith.constant 128 : i32
    %12 = vector.broadcast %c128_i32 : i32 to vector<64x1xi32>
    %13 = arith.cmpi slt, %11, %12 : vector<64x1xi32>
    %14 = arith.extf %6 : vector<64x8xbf16> to vector<64x8xf32>
    %cst_7 = arith.constant 0.000000e+00 : f32
    %15 = vector.shape_cast %13 : vector<64x1xi1> to vector<64x1xi1>
    %16 = vector.broadcast %15 : vector<64x1xi1> to vector<64x8xi1>
    %17 = vector.broadcast %cst_7 : f32 to vector<64x8xf32>
    %18 = arith.select %16, %14, %17 : vector<64x8xi1>, vector<64x8xf32>
    %cst_8 = arith.constant dense<0.000000e+00> : vector<8xf32>
    %19 = vector.multi_reduction <add>, %18, %cst_8 [0] : vector<64x8xf32> to vector<8xf32>
    %20 = vector.shape_cast %19 : vector<8xf32> to vector<1x8xf32>
    %21 = arith.mulf %18, %18 : vector<64x8xf32>
    %cst_9 = arith.constant dense<0.000000e+00> : vector<8xf32>
    %22 = vector.multi_reduction <add>, %21, %cst_9 [0] : vector<64x8xf32> to vector<8xf32>
    %23 = vector.shape_cast %22 : vector<8xf32> to vector<1x8xf32>
    %24 = tpu.iota {dimensions = array<i32: 0>} : vector<8x8xi32>
    %c0_i32 = arith.constant 0 : i32
    %25 = vector.broadcast %c0_i32 : i32 to vector<8x8xi32>
    %26 = arith.cmpi eq, %24, %25 : vector<8x8xi32>
    %27 = vector.shape_cast %20 : vector<1x8xf32> to vector<1x8xf32>
    %28 = vector.broadcast %27 : vector<1x8xf32> to vector<8x8xf32>
    %29 = vector.shape_cast %23 : vector<1x8xf32> to vector<1x8xf32>
    %30 = vector.broadcast %29 : vector<1x8xf32> to vector<8x8xf32>
    %31 = arith.select %26, %28, %30 : vector<8x8xi1>, vector<8x8xf32>
    %32 = vector.shape_cast %31 : vector<8x8xf32> to vector<1x8x8xf32>
    %c0_10 = arith.constant 0 : index
    %c0_11 = arith.constant 0 : index
    %c0_12 = arith.constant 0 : index
    %33 = vector.load %arg5[%c0_10, %c0_11, %c0_12] : memref<1x8x8xf32, #tpu.memory_space<vmem>>, vector<1x8x8xf32>
    tpu.vector_store %arg5[%c0_10, %c0_11, %c0_12], %32 {strides = array<i32>} : memref<1x8x8xf32, #tpu.memory_space<vmem>>, vector<1x8x8xf32>,
    return
  }
  func.func @transform_0(%arg0: i32) -> (i32, i32) {
    %c0_i32 = arith.constant 0 : i32
    %c0_i32_0 = arith.constant 0 : i32
    return %arg0, %c0_i32 : i32, i32
  }
  func.func @transform_1(%arg0: i32) -> (i32, i32) {
    %c0_i32 = arith.constant 0 : i32
    %c0_i32_0 = arith.constant 0 : i32
    %c0_i32_1 = arith.constant 0 : i32
    return %c0_i32, %c0_i32_0 : i32, i32
  }
  func.func @transform_2(%arg0: i32) -> (i32, i32) {
    %c0_i32 = arith.constant 0 : i32
    %c0_i32_0 = arith.constant 0 : i32
    %c0_i32_1 = arith.constant 0 : i32
    return %c0_i32, %c0_i32_0 : i32, i32
  }
  func.func @transform_3(%arg0: i32) -> (i32, i32) {
    %c0_i32 = arith.constant 0 : i32
    %c0_i32_0 = arith.constant 0 : i32
    return %arg0, %c0_i32 : i32, i32
  }
  func.func @transform_4(%arg0: i32) -> (i32, i32, i32) {
    %c0_i32 = arith.constant 0 : i32
    %c0_i32_0 = arith.constant 0 : i32
    %c0_i32_1 = arith.constant 0 : i32
    return %arg0, %c0_i32, %c0_i32_0 : i32, i32, i32
  }
}

module attributes {stable_mosaic.version = 11 : i64} {
  func.func @_bn_relu_kernel(%arg0: i32, %arg1: memref<64x8xbf16, #tpu.memory_space<vmem>>, %arg2: memref<1x8xf32, #tpu.memory_space<vmem>>, %arg3: memref<1x8xf32, #tpu.memory_space<vmem>>, %arg4: memref<64x8xf32, #tpu.memory_space<vmem>>) attributes {dimension_semantics = [#tpu.dimension_semantics<parallel>], iteration_bounds = array<i64: 2>, scalar_prefetch = 0 : i64, scratch_operands = 0 : i64, tpu.core_type = #tpu.core_type<tc>, window_params = [{transform_indices = @transform_0, window_bounds = array<i64: 64, 8>}, {pipeline_mode = #tpu.pipeline_mode<synchronous>, transform_indices = @transform_1, window_bounds = array<i64: 1, 8>}, {pipeline_mode = #tpu.pipeline_mode<synchronous>, transform_indices = @transform_2, window_bounds = array<i64: 1, 8>}, {transform_indices = @transform_3, window_bounds = array<i64: 64, 8>}]} {
    %c0 = arith.constant 0 : index
    %c0_0 = arith.constant 0 : index
    %0 = vector.load %arg1[%c0, %c0_0] : memref<64x8xbf16, #tpu.memory_space<vmem>>, vector<64x8xbf16>
    %1 = arith.extf %0 : vector<64x8xbf16> to vector<64x8xf32>
    %c0_1 = arith.constant 0 : index
    %c0_2 = arith.constant 0 : index
    %2 = vector.load %arg2[%c0_1, %c0_2] : memref<1x8xf32, #tpu.memory_space<vmem>>, vector<1x8xf32>
    %3 = vector.broadcast %2 : vector<1x8xf32> to vector<64x8xf32>
    %4 = arith.mulf %1, %3 : vector<64x8xf32>
    %c0_3 = arith.constant 0 : index
    %c0_4 = arith.constant 0 : index
    %5 = vector.load %arg3[%c0_3, %c0_4] : memref<1x8xf32, #tpu.memory_space<vmem>>, vector<1x8xf32>
    %6 = vector.broadcast %5 : vector<1x8xf32> to vector<64x8xf32>
    %7 = arith.addf %4, %6 : vector<64x8xf32>
    %cst = arith.constant 0.000000e+00 : f32
    %8 = vector.broadcast %cst : f32 to vector<64x8xf32>
    %9 = arith.maximumf %7, %8 : vector<64x8xf32>
    %c0_5 = arith.constant 0 : index
    %c0_6 = arith.constant 0 : index
    %10 = vector.load %arg4[%c0_5, %c0_6] : memref<64x8xf32, #tpu.memory_space<vmem>>, vector<64x8xf32>
    tpu.vector_store %arg4[%c0_5, %c0_6], %9 {strides = array<i32>} : memref<64x8xf32, #tpu.memory_space<vmem>>, vector<64x8xf32>,
    return
  }
  func.func @transform_0(%arg0: i32) -> (i32, i32) {
    %c0_i32 = arith.constant 0 : i32
    %c0_i32_0 = arith.constant 0 : i32
    return %arg0, %c0_i32 : i32, i32
  }
  func.func @transform_1(%arg0: i32) -> (i32, i32) {
    %c0_i32 = arith.constant 0 : i32
    %c0_i32_0 = arith.constant 0 : i32
    %c0_i32_1 = arith.constant 0 : i32
    return %c0_i32, %c0_i32_0 : i32, i32
  }
  func.func @transform_2(%arg0: i32) -> (i32, i32) {
    %c0_i32 = arith.constant 0 : i32
    %c0_i32_0 = arith.constant 0 : i32
    %c0_i32_1 = arith.constant 0 : i32
    return %c0_i32, %c0_i32_0 : i32, i32
  }
  func.func @transform_3(%arg0: i32) -> (i32, i32) {
    %c0_i32 = arith.constant 0 : i32
    %c0_i32_0 = arith.constant 0 : i32
    return %arg0, %c0_i32 : i32, i32
  }
}

module attributes {stable_mosaic.version = 11 : i64} {
  func.func @_conv2_image_kernel(%arg0: i32, %arg1: memref<1x10x10x8xbf16, #tpu.memory_space<vmem>>, %arg2: memref<1x1x8xf32, #tpu.memory_space<vmem>>, %arg3: memref<1x1x8xf32, #tpu.memory_space<vmem>>, %arg4: memref<9x8x8xbf16, #tpu.memory_space<vmem>>, %arg5: memref<1x8xf32, #tpu.memory_space<vmem>>, %arg6: memref<1x64x8xbf16, #tpu.memory_space<vmem>>, %arg7: memref<1x8x8xf32, #tpu.memory_space<vmem>>) attributes {dimension_semantics = [#tpu.dimension_semantics<parallel>], iteration_bounds = array<i64: 2>, scalar_prefetch = 0 : i64, scratch_operands = 0 : i64, tpu.core_type = #tpu.core_type<tc>, window_params = [{transform_indices = @transform_0, window_bounds = array<i64: 1, 10, 10, 8>}, {pipeline_mode = #tpu.pipeline_mode<synchronous>, transform_indices = @transform_1, window_bounds = array<i64: 1, 1, 8>}, {pipeline_mode = #tpu.pipeline_mode<synchronous>, transform_indices = @transform_2, window_bounds = array<i64: 1, 1, 8>}, {pipeline_mode = #tpu.pipeline_mode<synchronous>, transform_indices = @transform_3, window_bounds = array<i64: 9, 8, 8>}, {pipeline_mode = #tpu.pipeline_mode<synchronous>, transform_indices = @transform_4, window_bounds = array<i64: 1, 8>}, {transform_indices = @transform_5, window_bounds = array<i64: 1, 64, 8>}, {transform_indices = @transform_6, window_bounds = array<i64: 1, 8, 8>}]} {
    %c0 = arith.constant 0 : index
    %c0_0 = arith.constant 0 : index
    %c0_1 = arith.constant 0 : index
    %c0_2 = arith.constant 0 : index
    %0 = vector.load %arg1[%c0, %c0_0, %c0_1, %c0_2] : memref<1x10x10x8xbf16, #tpu.memory_space<vmem>>, vector<1x10x10x8xbf16>
    %1 = vector.shape_cast %0 : vector<1x10x10x8xbf16> to vector<10x10x8xbf16>
    %2 = arith.extf %1 : vector<10x10x8xbf16> to vector<10x10x8xf32>
    %c0_3 = arith.constant 0 : index
    %c0_4 = arith.constant 0 : index
    %c0_5 = arith.constant 0 : index
    %3 = vector.load %arg2[%c0_3, %c0_4, %c0_5] : memref<1x1x8xf32, #tpu.memory_space<vmem>>, vector<1x1x8xf32>
    %4 = vector.broadcast %3 : vector<1x1x8xf32> to vector<10x10x8xf32>
    %5 = arith.mulf %2, %4 : vector<10x10x8xf32>
    %c0_6 = arith.constant 0 : index
    %c0_7 = arith.constant 0 : index
    %c0_8 = arith.constant 0 : index
    %6 = vector.load %arg3[%c0_6, %c0_7, %c0_8] : memref<1x1x8xf32, #tpu.memory_space<vmem>>, vector<1x1x8xf32>
    %7 = vector.broadcast %6 : vector<1x1x8xf32> to vector<10x10x8xf32>
    %8 = arith.addf %5, %7 : vector<10x10x8xf32>
    %cst = arith.constant 0.000000e+00 : f32
    %9 = vector.broadcast %cst : f32 to vector<10x10x8xf32>
    %10 = arith.maximumf %8, %9 : vector<10x10x8xf32>
    %11 = tpu.iota {dimensions = array<i32: 0>} : vector<10x10x8xi32>
    %12 = tpu.iota {dimensions = array<i32: 1>} : vector<10x10x8xi32>
    %c1_i32 = arith.constant 1 : i32
    %13 = vector.broadcast %c1_i32 : i32 to vector<10x10x8xi32>
    %14 = arith.cmpi sge, %11, %13 : vector<10x10x8xi32>
    %c8_i32 = arith.constant 8 : i32
    %15 = vector.broadcast %c8_i32 : i32 to vector<10x10x8xi32>
    %16 = arith.cmpi sle, %11, %15 : vector<10x10x8xi32>
    %17 = arith.andi %14, %16 : vector<10x10x8xi1>
    %c1_i32_9 = arith.constant 1 : i32
    %18 = vector.broadcast %c1_i32_9 : i32 to vector<10x10x8xi32>
    %19 = arith.cmpi sge, %12, %18 : vector<10x10x8xi32>
    %20 = arith.andi %17, %19 : vector<10x10x8xi1>
    %c8_i32_10 = arith.constant 8 : i32
    %21 = vector.broadcast %c8_i32_10 : i32 to vector<10x10x8xi32>
    %22 = arith.cmpi sle, %12, %21 : vector<10x10x8xi32>
    %23 = arith.andi %20, %22 : vector<10x10x8xi1>
    %cst_11 = arith.constant 0.000000e+00 : f32
    %24 = vector.broadcast %cst_11 : f32 to vector<10x10x8xf32>
    %25 = arith.select %23, %10, %24 : vector<10x10x8xi1>, vector<10x10x8xf32>
    %26 = arith.truncf %25 : vector<10x10x8xf32> to vector<10x10x8xbf16>
    %27 = vector.extract_strided_slice %26 {offsets = [0, 0, 0], sizes = [8, 8, 8], strides = [1, 1, 1]} : vector<10x10x8xbf16> to vector<8x8x8xbf16>
    %28 = vector.shape_cast %27 : vector<8x8x8xbf16> to vector<64x8xbf16>
    %c0_12 = arith.constant 0 : index
    %c0_13 = arith.constant 0 : index
    %c0_14 = arith.constant 0 : index
    %29 = vector.load %arg4[%c0_12, %c0_13, %c0_14] : memref<9x8x8xbf16, #tpu.memory_space<vmem>>, vector<1x8x8xbf16>
    %30 = vector.shape_cast %29 : vector<1x8x8xbf16> to vector<8x8xbf16>
    %cst_15 = arith.constant dense<0.000000e+00> : vector<64x8xf32>
    %31 = tpu.matmul %28, %30, %cst_15 {dimension_numbers = #tpu.dot_dimension_numbers<[1], [0], [0], [1], [0, 0, 1, 1], [], []>} : vector<64x8xbf16>, vector<8x8xbf16>, vector<64x8xf32> -> vector<64x8xf32>
    %32 = vector.extract_strided_slice %26 {offsets = [0, 1, 0], sizes = [8, 8, 8], strides = [1, 1, 1]} : vector<10x10x8xbf16> to vector<8x8x8xbf16>
    %33 = vector.shape_cast %32 : vector<8x8x8xbf16> to vector<64x8xbf16>
    %c1 = arith.constant 1 : index
    %c0_16 = arith.constant 0 : index
    %c0_17 = arith.constant 0 : index
    %34 = vector.load %arg4[%c1, %c0_16, %c0_17] : memref<9x8x8xbf16, #tpu.memory_space<vmem>>, vector<1x8x8xbf16>
    %35 = vector.shape_cast %34 : vector<1x8x8xbf16> to vector<8x8xbf16>
    %cst_18 = arith.constant dense<0.000000e+00> : vector<64x8xf32>
    %36 = tpu.matmul %33, %35, %cst_18 {dimension_numbers = #tpu.dot_dimension_numbers<[1], [0], [0], [1], [0, 0, 1, 1], [], []>} : vector<64x8xbf16>, vector<8x8xbf16>, vector<64x8xf32> -> vector<64x8xf32>
    %37 = arith.addf %31, %36 : vector<64x8xf32>
    %38 = vector.extract_strided_slice %26 {offsets = [0, 2, 0], sizes = [8, 8, 8], strides = [1, 1, 1]} : vector<10x10x8xbf16> to vector<8x8x8xbf16>
    %39 = vector.shape_cast %38 : vector<8x8x8xbf16> to vector<64x8xbf16>
    %c2 = arith.constant 2 : index
    %c0_19 = arith.constant 0 : index
    %c0_20 = arith.constant 0 : index
    %40 = vector.load %arg4[%c2, %c0_19, %c0_20] : memref<9x8x8xbf16, #tpu.memory_space<vmem>>, vector<1x8x8xbf16>
    %41 = vector.shape_cast %40 : vector<1x8x8xbf16> to vector<8x8xbf16>
    %cst_21 = arith.constant dense<0.000000e+00> : vector<64x8xf32>
    %42 = tpu.matmul %39, %41, %cst_21 {dimension_numbers = #tpu.dot_dimension_numbers<[1], [0], [0], [1], [0, 0, 1, 1], [], []>} : vector<64x8xbf16>, vector<8x8xbf16>, vector<64x8xf32> -> vector<64x8xf32>
    %43 = arith.addf %37, %42 : vector<64x8xf32>
    %44 = vector.extract_strided_slice %26 {offsets = [1, 0, 0], sizes = [8, 8, 8], strides = [1, 1, 1]} : vector<10x10x8xbf16> to vector<8x8x8xbf16>
    %45 = vector.shape_cast %44 : vector<8x8x8xbf16> to vector<64x8xbf16>
    %c3 = arith.constant 3 : index
    %c0_22 = arith.constant 0 : index
    %c0_23 = arith.constant 0 : index
    %46 = vector.load %arg4[%c3, %c0_22, %c0_23] : memref<9x8x8xbf16, #tpu.memory_space<vmem>>, vector<1x8x8xbf16>
    %47 = vector.shape_cast %46 : vector<1x8x8xbf16> to vector<8x8xbf16>
    %cst_24 = arith.constant dense<0.000000e+00> : vector<64x8xf32>
    %48 = tpu.matmul %45, %47, %cst_24 {dimension_numbers = #tpu.dot_dimension_numbers<[1], [0], [0], [1], [0, 0, 1, 1], [], []>} : vector<64x8xbf16>, vector<8x8xbf16>, vector<64x8xf32> -> vector<64x8xf32>
    %49 = arith.addf %43, %48 : vector<64x8xf32>
    %50 = vector.extract_strided_slice %26 {offsets = [1, 1, 0], sizes = [8, 8, 8], strides = [1, 1, 1]} : vector<10x10x8xbf16> to vector<8x8x8xbf16>
    %51 = vector.shape_cast %50 : vector<8x8x8xbf16> to vector<64x8xbf16>
    %c4 = arith.constant 4 : index
    %c0_25 = arith.constant 0 : index
    %c0_26 = arith.constant 0 : index
    %52 = vector.load %arg4[%c4, %c0_25, %c0_26] : memref<9x8x8xbf16, #tpu.memory_space<vmem>>, vector<1x8x8xbf16>
    %53 = vector.shape_cast %52 : vector<1x8x8xbf16> to vector<8x8xbf16>
    %cst_27 = arith.constant dense<0.000000e+00> : vector<64x8xf32>
    %54 = tpu.matmul %51, %53, %cst_27 {dimension_numbers = #tpu.dot_dimension_numbers<[1], [0], [0], [1], [0, 0, 1, 1], [], []>} : vector<64x8xbf16>, vector<8x8xbf16>, vector<64x8xf32> -> vector<64x8xf32>
    %55 = arith.addf %49, %54 : vector<64x8xf32>
    %56 = vector.extract_strided_slice %26 {offsets = [1, 2, 0], sizes = [8, 8, 8], strides = [1, 1, 1]} : vector<10x10x8xbf16> to vector<8x8x8xbf16>
    %57 = vector.shape_cast %56 : vector<8x8x8xbf16> to vector<64x8xbf16>
    %c5 = arith.constant 5 : index
    %c0_28 = arith.constant 0 : index
    %c0_29 = arith.constant 0 : index
    %58 = vector.load %arg4[%c5, %c0_28, %c0_29] : memref<9x8x8xbf16, #tpu.memory_space<vmem>>, vector<1x8x8xbf16>
    %59 = vector.shape_cast %58 : vector<1x8x8xbf16> to vector<8x8xbf16>
    %cst_30 = arith.constant dense<0.000000e+00> : vector<64x8xf32>
    %60 = tpu.matmul %57, %59, %cst_30 {dimension_numbers = #tpu.dot_dimension_numbers<[1], [0], [0], [1], [0, 0, 1, 1], [], []>} : vector<64x8xbf16>, vector<8x8xbf16>, vector<64x8xf32> -> vector<64x8xf32>
    %61 = arith.addf %55, %60 : vector<64x8xf32>
    %62 = vector.extract_strided_slice %26 {offsets = [2, 0, 0], sizes = [8, 8, 8], strides = [1, 1, 1]} : vector<10x10x8xbf16> to vector<8x8x8xbf16>
    %63 = vector.shape_cast %62 : vector<8x8x8xbf16> to vector<64x8xbf16>
    %c6 = arith.constant 6 : index
    %c0_31 = arith.constant 0 : index
    %c0_32 = arith.constant 0 : index
    %64 = vector.load %arg4[%c6, %c0_31, %c0_32] : memref<9x8x8xbf16, #tpu.memory_space<vmem>>, vector<1x8x8xbf16>
    %65 = vector.shape_cast %64 : vector<1x8x8xbf16> to vector<8x8xbf16>
    %cst_33 = arith.constant dense<0.000000e+00> : vector<64x8xf32>
    %66 = tpu.matmul %63, %65, %cst_33 {dimension_numbers = #tpu.dot_dimension_numbers<[1], [0], [0], [1], [0, 0, 1, 1], [], []>} : vector<64x8xbf16>, vector<8x8xbf16>, vector<64x8xf32> -> vector<64x8xf32>
    %67 = arith.addf %61, %66 : vector<64x8xf32>
    %68 = vector.extract_strided_slice %26 {offsets = [2, 1, 0], sizes = [8, 8, 8], strides = [1, 1, 1]} : vector<10x10x8xbf16> to vector<8x8x8xbf16>
    %69 = vector.shape_cast %68 : vector<8x8x8xbf16> to vector<64x8xbf16>
    %c7 = arith.constant 7 : index
    %c0_34 = arith.constant 0 : index
    %c0_35 = arith.constant 0 : index
    %70 = vector.load %arg4[%c7, %c0_34, %c0_35] : memref<9x8x8xbf16, #tpu.memory_space<vmem>>, vector<1x8x8xbf16>
    %71 = vector.shape_cast %70 : vector<1x8x8xbf16> to vector<8x8xbf16>
    %cst_36 = arith.constant dense<0.000000e+00> : vector<64x8xf32>
    %72 = tpu.matmul %69, %71, %cst_36 {dimension_numbers = #tpu.dot_dimension_numbers<[1], [0], [0], [1], [0, 0, 1, 1], [], []>} : vector<64x8xbf16>, vector<8x8xbf16>, vector<64x8xf32> -> vector<64x8xf32>
    %73 = arith.addf %67, %72 : vector<64x8xf32>
    %74 = vector.extract_strided_slice %26 {offsets = [2, 2, 0], sizes = [8, 8, 8], strides = [1, 1, 1]} : vector<10x10x8xbf16> to vector<8x8x8xbf16>
    %75 = vector.shape_cast %74 : vector<8x8x8xbf16> to vector<64x8xbf16>
    %c8 = arith.constant 8 : index
    %c0_37 = arith.constant 0 : index
    %c0_38 = arith.constant 0 : index
    %76 = vector.load %arg4[%c8, %c0_37, %c0_38] : memref<9x8x8xbf16, #tpu.memory_space<vmem>>, vector<1x8x8xbf16>
    %77 = vector.shape_cast %76 : vector<1x8x8xbf16> to vector<8x8xbf16>
    %cst_39 = arith.constant dense<0.000000e+00> : vector<64x8xf32>
    %78 = tpu.matmul %75, %77, %cst_39 {dimension_numbers = #tpu.dot_dimension_numbers<[1], [0], [0], [1], [0, 0, 1, 1], [], []>} : vector<64x8xbf16>, vector<8x8xbf16>, vector<64x8xf32> -> vector<64x8xf32>
    %79 = arith.addf %73, %78 : vector<64x8xf32>
    %c0_40 = arith.constant 0 : index
    %c0_41 = arith.constant 0 : index
    %80 = vector.load %arg5[%c0_40, %c0_41] : memref<1x8xf32, #tpu.memory_space<vmem>>, vector<1x8xf32>
    %81 = vector.broadcast %80 : vector<1x8xf32> to vector<64x8xf32>
    %82 = arith.addf %79, %81 : vector<64x8xf32>
    %83 = arith.truncf %82 : vector<64x8xf32> to vector<64x8xbf16>
    %84 = vector.shape_cast %83 : vector<64x8xbf16> to vector<1x64x8xbf16>
    %c0_42 = arith.constant 0 : index
    %c0_43 = arith.constant 0 : index
    %c0_44 = arith.constant 0 : index
    %85 = vector.load %arg6[%c0_42, %c0_43, %c0_44] : memref<1x64x8xbf16, #tpu.memory_space<vmem>>, vector<1x64x8xbf16>
    tpu.vector_store %arg6[%c0_42, %c0_43, %c0_44], %84 {strides = array<i32>} : memref<1x64x8xbf16, #tpu.memory_space<vmem>>, vector<1x64x8xbf16>,
    %86 = arith.extf %83 : vector<64x8xbf16> to vector<64x8xf32>
    %cst_45 = arith.constant dense<0.000000e+00> : vector<8xf32>
    %87 = vector.multi_reduction <add>, %86, %cst_45 [0] : vector<64x8xf32> to vector<8xf32>
    %88 = vector.shape_cast %87 : vector<8xf32> to vector<1x8xf32>
    %89 = arith.mulf %86, %86 : vector<64x8xf32>
    %cst_46 = arith.constant dense<0.000000e+00> : vector<8xf32>
    %90 = vector.multi_reduction <add>, %89, %cst_46 [0] : vector<64x8xf32> to vector<8xf32>
    %91 = vector.shape_cast %90 : vector<8xf32> to vector<1x8xf32>
    %92 = tpu.iota {dimensions = array<i32: 0>} : vector<8x8xi32>
    %c0_i32 = arith.constant 0 : i32
    %93 = vector.broadcast %c0_i32 : i32 to vector<8x8xi32>
    %94 = arith.cmpi eq, %92, %93 : vector<8x8xi32>
    %95 = vector.shape_cast %88 : vector<1x8xf32> to vector<1x8xf32>
    %96 = vector.broadcast %95 : vector<1x8xf32> to vector<8x8xf32>
    %97 = vector.shape_cast %91 : vector<1x8xf32> to vector<1x8xf32>
    %98 = vector.broadcast %97 : vector<1x8xf32> to vector<8x8xf32>
    %99 = arith.select %94, %96, %98 : vector<8x8xi1>, vector<8x8xf32>
    %100 = vector.shape_cast %99 : vector<8x8xf32> to vector<1x8x8xf32>
    %c0_47 = arith.constant 0 : index
    %c0_48 = arith.constant 0 : index
    %c0_49 = arith.constant 0 : index
    %101 = vector.load %arg7[%c0_47, %c0_48, %c0_49] : memref<1x8x8xf32, #tpu.memory_space<vmem>>, vector<1x8x8xf32>
    tpu.vector_store %arg7[%c0_47, %c0_48, %c0_49], %100 {strides = array<i32>} : memref<1x8x8xf32, #tpu.memory_space<vmem>>, vector<1x8x8xf32>,
    return
  }
  func.func @transform_0(%arg0: i32) -> (i32, i32, i32, i32) {
    %c0_i32 = arith.constant 0 : i32
    %c0_i32_0 = arith.constant 0 : i32
    %c0_i32_1 = arith.constant 0 : i32
    %c0_i32_2 = arith.constant 0 : i32
    return %arg0, %c0_i32, %c0_i32_0, %c0_i32_1 : i32, i32, i32, i32
  }
  func.func @transform_1(%arg0: i32) -> (i32, i32, i32) {
    %c0_i32 = arith.constant 0 : i32
    %c0_i32_0 = arith.constant 0 : i32
    %c0_i32_1 = arith.constant 0 : i32
    %c0_i32_2 = arith.constant 0 : i32
    return %c0_i32, %c0_i32_0, %c0_i32_1 : i32, i32, i32
  }
  func.func @transform_2(%arg0: i32) -> (i32, i32, i32) {
    %c0_i32 = arith.constant 0 : i32
    %c0_i32_0 = arith.constant 0 : i32
    %c0_i32_1 = arith.constant 0 : i32
    %c0_i32_2 = arith.constant 0 : i32
    return %c0_i32, %c0_i32_0, %c0_i32_1 : i32, i32, i32
  }
  func.func @transform_3(%arg0: i32) -> (i32, i32, i32) {
    %c0_i32 = arith.constant 0 : i32
    %c0_i32_0 = arith.constant 0 : i32
    %c0_i32_1 = arith.constant 0 : i32
    %c0_i32_2 = arith.constant 0 : i32
    return %c0_i32, %c0_i32_0, %c0_i32_1 : i32, i32, i32
  }
  func.func @transform_4(%arg0: i32) -> (i32, i32) {
    %c0_i32 = arith.constant 0 : i32
    %c0_i32_0 = arith.constant 0 : i32
    %c0_i32_1 = arith.constant 0 : i32
    return %c0_i32, %c0_i32_0 : i32, i32
  }
  func.func @transform_5(%arg0: i32) -> (i32, i32, i32) {
    %c0_i32 = arith.constant 0 : i32
    %c0_i32_0 = arith.constant 0 : i32
    %c0_i32_1 = arith.constant 0 : i32
    return %arg0, %c0_i32, %c0_i32_0 : i32, i32, i32
  }
  func.func @transform_6(%arg0: i32) -> (i32, i32, i32) {
    %c0_i32 = arith.constant 0 : i32
    %c0_i32_0 = arith.constant 0 : i32
    %c0_i32_1 = arith.constant 0 : i32
    return %arg0, %c0_i32, %c0_i32_0 : i32, i32, i32
  }
}

</mosaic_0001>

<llo_original>
// kernel: _downblock_forward_impl.5
$region0: #{_downblock_forward_impl.5}
  #allocation0 [shape = 'u32[]', space=smem, size = 0x4, offset = 0x4, fixed_abs, tag = 'smem constant byte address 0x4 - core index']
  #allocation1 [shape = 'u32[144,128]{1,0:T(1,128)}', space=vmem, size = 0x12000, scoped, tag = 'internal scratch']
  %s0 = inlined_call_operand.vmem [shape: bf16[128,8], index: 0, kind: input, shape index: {}]
  %s1 = inlined_call_operand.vmem [shape: f32[1,8], index: 1, kind: input, shape index: {}]
  %s2 = inlined_call_operand.vmem [shape: f32[1,8], index: 2, kind: input, shape index: {}]
  %s3 = inlined_call_operand.vmem [shape: f32[128,8], index: 3, kind: output, shape index: {}]
  %s4 = sld [smem:[#allocation0]]
  $region45: #{_downblock_forward_impl.5} parent=0
    _
  %s6 = ssub.s32 1, %s4
  %s7 = scalar_select 0, %s6, %s4
  loop: start=0, step=1, limit=4
  $region2: #{_downblock_forward_impl.5} parent=0 // loop_pre_header
    _
  $region3: #{_downblock_forward_impl.5} parent=0 // loop_header
    %s9 = sphi 0, %s13
    %p10 = scmp.ge.s32.totalorder %s9, 4
    %s19 = sphi 0, %s21
    %s22 = sphi 0, %s19
    %s23 = sphi 0, %s22
    %s39 = sphi 0, %s23
    %s43 = sphi 0, %s43
    %s45 = sphi 0, %s43
    %s46 = sphi 0, %s45
    %s60 = sphi 0, %s46
    %s64 = sphi 0, %s64
    %s66 = sphi 0, %s64
    %s67 = sphi 0, %s66
    %s81 = sphi 0, %s67
    %s87 = sphi 0, %s89
    %s90 = sphi 0, %s87
    %s91 = sphi 0, %s90
    %s107 = sphi 0, %s91
  $region4: #{_downblock_forward_impl.5} parent=0 // loop_header_branch
    %12 = sbr.rel (%p10) target = $region8
  $region5: #{_downblock_forward_impl.5} parent=0 // loop_body
    %s14 = ssub.s32 %s9, 1
    %s15 = ssub.s32 %s9, 2
    %s16 = sadd.s32 %s9, 1
    %s17 = ssub.s32 %s9, %s16
    %p18 = scmp.eq.s32.totalorder %s17, 0
    %s20 = sadd.s32 %s19, 1
    %s21 = scalar_select %p18, %s19, %s20
    %p24 = pneg %p18
    %p25 = scmp.eq.s32.totalorder %s9, 1
    %p26 = por %p24, %p25
    %p27 = scmp.ne.s32.totalorder %s19, %s22
    %p28 = scmp.eq.s32.totalorder %s9, 0
    %p29 = por %p27, %p28
    %p30 = scmp.ne.s32.totalorder %s19, %s22
    %p31 = scmp.eq.s32.totalorder %s14, 1
    %p32 = por %p30, %p31
    %p33 = scmp.ne.s32.totalorder %s22, %s23
    %p34 = scmp.eq.s32.totalorder %s14, 0
    %p35 = por %p33, %p34
    %p36 = scmp.ne.s32.totalorder %s22, %s23
    %p37 = scmp.eq.s32.totalorder %s15, 1
    %p38 = por %p36, %p37
    %p40 = scmp.ne.s32.totalorder %s23, %s39
    %p41 = scmp.eq.s32.totalorder %s15, 0
    %p42 = por %p40, %p41
    %s44 = sadd.s32 %s43, 1
    %p47 = scmp.eq.s32.totalorder %s9, 1
    %p48 = scmp.ne.s32.totalorder %s43, %s45
    %p49 = scmp.eq.s32.totalorder %s9, 0
    %p50 = por %p48, %p49
    %p51 = scmp.ne.s32.totalorder %s43, %s45
    %p52 = scmp.eq.s32.totalorder %s14, 1
    %p53 = por %p51, %p52
    %p54 = scmp.ne.s32.totalorder %s45, %s46
    %p55 = scmp.eq.s32.totalorder %s14, 0
    %p56 = por %p54, %p55
    %p57 = scmp.ne.s32.totalorder %s45, %s46
    %p58 = scmp.eq.s32.totalorder %s15, 1
    %p59 = por %p57, %p58
    %p61 = scmp.ne.s32.totalorder %s46, %s60
    %p62 = scmp.eq.s32.totalorder %s15, 0
    %p63 = por %p61, %p62
    %s65 = sadd.s32 %s64, 1
    %p68 = scmp.eq.s32.totalorder %s9, 1
    %p69 = scmp.ne.s32.totalorder %s64, %s66
    %p70 = scmp.eq.s32.totalorder %s9, 0
    %p71 = por %p69, %p70
    %p72 = scmp.ne.s32.totalorder %s64, %s66
    %p73 = scmp.eq.s32.totalorder %s14, 1
    %p74 = por %p72, %p73
    %p75 = scmp.ne.s32.totalorder %s66, %s67
    %p76 = scmp.eq.s32.totalorder %s14, 0
    %p77 = por %p75, %p76
    %p78 = scmp.ne.s32.totalorder %s66, %s67
    %p79 = scmp.eq.s32.totalorder %s15, 1
    %p80 = por %p78, %p79
    %p82 = scmp.ne.s32.totalorder %s67, %s81
    %p83 = scmp.eq.s32.totalorder %s15, 0
    %p84 = por %p82, %p83
    %s85 = ssub.s32 %s9, %s16
    %p86 = scmp.eq.s32.totalorder %s85, 0
    %s88 = sadd.s32 %s87, 1
    %s89 = scalar_select %p86, %s87, %s88
    %p92 = pneg %p86
    %p93 = scmp.eq.s32.totalorder %s9, 1
    %p94 = por %p92, %p93
    %p95 = scmp.ne.s32.totalorder %s87, %s90
    %p96 = scmp.eq.s32.totalorder %s9, 0
    %p97 = por %p95, %p96
    %p98 = scmp.ne.s32.totalorder %s87, %s90
    %p99 = scmp.eq.s32.totalorder %s14, 1
    %p100 = por %p98, %p99
    %p101 = scmp.ne.s32.totalorder %s90, %s91
    %p102 = scmp.eq.s32.totalorder %s14, 0
    %p103 = por %p101, %p102
    %p104 = scmp.ne.s32.totalorder %s90, %s91
    %p105 = scmp.eq.s32.totalorder %s15, 1
    %p106 = por %p104, %p105
    %p108 = scmp.ne.s32.totalorder %s91, %s107
    %p109 = scmp.eq.s32.totalorder %s15, 0
    %p110 = por %p108, %p109
    %p111 = scmp.le.s32.totalorder 1, %s9
    %p112 = scmp.lt.s32.totalorder %s9, 3
    %p113 = pnand %p111, %p112
    %p114 = pneg %p113
    // Predicated region
    $region9: #{_downblock_forward_impl.5} parent=5 // pred_check
      _
    $region10: #{_downblock_forward_impl.5} parent=5 // pred_check_branch
      %116 = sbr.rel (%p113) target = $region12
    $region11: #{_downblock_forward_impl.5} parent=5 // pred_region
      %s117 = ssub.s32 %s9, 1
      // Predicated region
      $region13: #{_downblock_forward_impl.5} parent=11 // pred_check
        %p118 = pneg %p56
      $region14: #{_downblock_forward_impl.5} parent=11 // pred_check_branch
        %120 = sbr.rel (%p118) target = $region16
      $region15: #{_downblock_forward_impl.5} parent=11 // pred_region
        _
      $region16: #{_downblock_forward_impl.5} parent=11 // pred_fallthru
        _
      // Predicated region
      $region17: #{_downblock_forward_impl.5} parent=11 // pred_check
        %p121 = pneg %p77
      $region18: #{_downblock_forward_impl.5} parent=11 // pred_check_branch
        %123 = sbr.rel (%p121) target = $region20
      $region19: #{_downblock_forward_impl.5} parent=11 // pred_region
        _
      $region20: #{_downblock_forward_impl.5} parent=11 // pred_fallthru
        _
    $region12: #{_downblock_forward_impl.5} parent=5 // pred_fallthru
      _
    %p124 = scmp.lt.s32.totalorder %s9, 2
    // Predicated region
    $region21: #{_downblock_forward_impl.5} parent=5 // pred_check
      %p125 = pneg %p124
    $region22: #{_downblock_forward_impl.5} parent=5 // pred_check_branch
      %127 = sbr.rel (%p125) target = $region24
    $region23: #{_downblock_forward_impl.5} parent=5 // pred_region
      // Predicated region
      $region25: #{_downblock_forward_impl.5} parent=23 // pred_check
        %p128 = pneg %p29
      $region26: #{_downblock_forward_impl.5} parent=23 // pred_check_branch
        %130 = sbr.rel (%p128) target = $region28
      $region27: #{_downblock_forward_impl.5} parent=23 // pred_region
        %s131 = smul.u32 8, %s9
        %p132 = scmp.lt.s32.totalorder %s131, 15
        %s133 = scalar_select %p132, %s131, 15
        %s134 = smul.addr %s133, 4
        %s135 = scalar_lea.vmem %s0, %s134
        %s136 = smul.u32 8, %s9
      $region28: #{_downblock_forward_impl.5} parent=23 // pred_fallthru
        _
    $region24: #{_downblock_forward_impl.5} parent=5 // pred_fallthru
      _
    %p137 = scmp.le.s32.totalorder 1, %s9
    %p138 = scmp.lt.s32.totalorder %s9, 3
    %p139 = pnand %p137, %p138
    %p140 = pneg %p139
    // Predicated region
    $region29: #{_downblock_forward_impl.5} parent=5 // pred_check
      _
    $region30: #{_downblock_forward_impl.5} parent=5 // pred_check_branch
      %142 = sbr.rel (%p139) target = $region32
    $region31: #{_downblock_forward_impl.5} parent=5 // pred_region
      %s143 = ssub.s32 %s9, 1
      %s144 = smul.u32 8, %s14
      %p145 = scmp.lt.s32.totalorder %s144, 15
      %s146 = scalar_select %p145, %s144, 15
      %s147 = smul.addr %s146, 4
      %s148 = scalar_lea.vmem %s0, %s147
      %p149 = pneg %p35
      %p150 = pneg %p32
      %p151 = pneg %p56
      %p152 = pneg %p53
      %p153 = pneg %p77
      %p154 = pneg %p74
      %p155 = pneg %p103
      %p156 = pneg %p100
      %s157 = smul.u32 8, %s14
      %p158 = scmp.lt.s32.totalorder %s157, 15
      %s159 = scalar_select %p158, %s157, 15
      %s160 = smul.addr %s159, 8
      %s161 = scalar_lea.vmem %s3, %s160
      %s162 = smul.u32 8, %s14
      %p163 = scmp.lt.s32.totalorder %s162, 15
      %s164 = scalar_select %p163, %s162, 15
      %s165 = smul.addr %s164, 4
      %s166 = scalar_lea.vmem %s0, %s165
      %s167 = smul.u32 8, %s14
      %s168 = smul.u32 8, %s14
      %p169 = scmp.lt.s32.totalorder %s168, 15
      %s170 = scalar_select %p169, %s168, 15
      %s171 = smul.addr %s170, 8
      %s172 = scalar_lea.vmem %s3, %s171
      %s173 = smul.u32 8, %s14
      %v174 = vld [vmem:[%s166] sm:$0xf]
      %v175 = vld [vmem:[%s166 + $0x4] sm:$0xf]
      %v176 = vld [vmem:[%s166 + $0x8] sm:$0xf]
      %v177 = vld [vmem:[%s166 + $0xc] sm:$0xf]
      %v178 = vld [vmem:[%s166 + $0x10] sm:$0xf]
      %v179 = vld [vmem:[%s166 + $0x14] sm:$0xf]
      %v180 = vld [vmem:[%s166 + $0x18] sm:$0xf]
      %v181 = vld [vmem:[%s166 + $0x1c] sm:$0xf]
      %v182 = vunpack.c.l.bf16 %v174
      %v183 = vunpack.c.l.bf16 %v175
      %v184 = vunpack.c.l.bf16 %v176
      %v185 = vunpack.c.l.bf16 %v177
      %v186 = vunpack.c.l.bf16 %v178
      %v187 = vunpack.c.l.bf16 %v179
      %v188 = vunpack.c.l.bf16 %v180
      %v189 = vunpack.c.l.bf16 %v181
      %v190 = vld [vmem:[%s1] sm:$0x1]
      %v192 = vlaneseq
      %v193 = vshrl.u32 %v192, 7
      %v194 = vsub.s32 0, %v193
      %v195 = vrot.slane %v190, %v194
      %v197 = vmul.f32 %v182, %v195
      %v198 = vmul.f32 %v183, %v195
      %v199 = vmul.f32 %v184, %v195
      %v200 = vmul.f32 %v185, %v195
      %v201 = vmul.f32 %v186, %v195
      %v202 = vmul.f32 %v187, %v195
      %v203 = vmul.f32 %v188, %v195
      %v204 = vmul.f32 %v189, %v195
      %v205 = vld [vmem:[%s2] sm:$0x1]
      %v207 = vlaneseq
      %v208 = vshrl.u32 %v207, 7
      %v209 = vsub.s32 0, %v208
      %v210 = vrot.slane %v205, %v209
      %v212 = vadd.f32 %v197, %v210
      %v213 = vadd.f32 %v198, %v210
      %v214 = vadd.f32 %v199, %v210
      %v215 = vadd.f32 %v200, %v210
      %v216 = vadd.f32 %v201, %v210
      %v217 = vadd.f32 %v202, %v210
      %v218 = vadd.f32 %v203, %v210
      %v219 = vadd.f32 %v204, %v210
      %v220 = vmax.f32 %v212, 0.0
      %v221 = vmax.f32 %v213, 0.0
      %v222 = vmax.f32 %v214, 0.0
      %v223 = vmax.f32 %v215, 0.0
      %v224 = vmax.f32 %v216, 0.0
      %v225 = vmax.f32 %v217, 0.0
      %v226 = vmax.f32 %v218, 0.0
      %v227 = vmax.f32 %v219, 0.0
      %vm228 = vcmask 64512
      %229 = vst.msk [vmem:[%s172] sm:$0xff] %vm228, %v220
      %230 = vst.msk [vmem:[%s172 + $0x8] sm:$0xff] %vm228, %v221
      %231 = vst.msk [vmem:[%s172 + $0x10] sm:$0xff] %vm228, %v222
      %232 = vst.msk [vmem:[%s172 + $0x18] sm:$0xff] %vm228, %v223
      %233 = vst.msk [vmem:[%s172 + $0x20] sm:$0xff] %vm228, %v224
      %234 = vst.msk [vmem:[%s172 + $0x28] sm:$0xff] %vm228, %v225
      %235 = vst.msk [vmem:[%s172 + $0x30] sm:$0xff] %vm228, %v226
      %236 = vst.msk [vmem:[%s172 + $0x38] sm:$0xff] %vm228, %v227
      %s237 = smul.u32 8, %s14
      %p238 = scmp.lt.s32.totalorder %s237, 15
      %s239 = scalar_select %p238, %s237, 15
      %s240 = smul.addr %s239, 8
      %s241 = scalar_lea.vmem %s3, %s240
      // Predicated region
      $region33: #{_downblock_forward_impl.5} parent=31 // pred_check
        %p242 = pneg %p100
      $region34: #{_downblock_forward_impl.5} parent=31 // pred_check_branch
        %244 = sbr.rel (%p242) target = $region36
      $region35: #{_downblock_forward_impl.5} parent=31 // pred_region
        %s245 = smul.u32 8, %s14
      $region36: #{_downblock_forward_impl.5} parent=31 // pred_fallthru
        _
    $region32: #{_downblock_forward_impl.5} parent=5 // pred_fallthru
      _
    %p246 = scmp.le.s32.totalorder 2, %s9
    // Predicated region
    $region37: #{_downblock_forward_impl.5} parent=5 // pred_check
      %p247 = pneg %p246
    $region38: #{_downblock_forward_impl.5} parent=5 // pred_check_branch
      %249 = sbr.rel (%p247) target = $region40
    $region39: #{_downblock_forward_impl.5} parent=5 // pred_region
      %s250 = ssub.s32 %s9, 2
      // Predicated region
      $region41: #{_downblock_forward_impl.5} parent=39 // pred_check
        %p251 = pneg %p106
      $region42: #{_downblock_forward_impl.5} parent=39 // pred_check_branch
        %253 = sbr.rel (%p251) target = $region44
      $region43: #{_downblock_forward_impl.5} parent=39 // pred_region
        %s254 = smul.u32 8, %s15
        %p255 = scmp.lt.s32.totalorder %s254, 15
        %s256 = scalar_select %p255, %s254, 15
        %s257 = smul.addr %s256, 8
        %s258 = scalar_lea.vmem %s3, %s257
      $region44: #{_downblock_forward_impl.5} parent=39 // pred_fallthru
        _
    $region40: #{_downblock_forward_impl.5} parent=5 // pred_fallthru
      _
  $region6: #{_downblock_forward_impl.5} parent=0 // loop_footer
    %s13 = sadd.s32 1, %s9
  $region7: #{_downblock_forward_impl.5} parent=0 // loop_footer_branch
    %8 = sbr.rel target = $region3
  $region8: #{_downblock_forward_impl.5} parent=0 // loop_exit
    _

// kernel: _downblock_forward_impl.3
$region0: #{_downblock_forward_impl.3}
  #allocation0 [shape = 'u32[]', space=smem, size = 0x4, offset = 0x4, fixed_abs, tag = 'smem constant byte address 0x4 - core index']
  #allocation1 [shape = 'u32[144,128]{1,0:T(1,128)}', space=vmem, size = 0x12000, scoped, tag = 'internal scratch']
  %s0 = inlined_call_operand.vmem [shape: bf16[128,36], index: 0, kind: input, shape index: {}]
  %s1 = inlined_call_operand.vmem [shape: bf16[36,8], index: 1, kind: input, shape index: {}]
  %s2 = inlined_call_operand.vmem [shape: f32[1,8], index: 2, kind: input, shape index: {}]
  %s3 = inlined_call_operand.vmem [shape: bf16[128,8], index: 3, kind: output, shape index: {0}]
  %s4 = inlined_call_operand.vmem [shape: f32[2,8,8], index: 4, kind: output, shape index: {1}]
  %5 = xla_tuple %s3, %s4
  %s6 = sld [smem:[#allocation0]]
  $region53: #{_downblock_forward_impl.3} parent=0
    _
  %s8 = ssub.s32 1, %s6
  %s9 = scalar_select 0, %s8, %s6
  loop: start=0, step=1, limit=4
  $region2: #{_downblock_forward_impl.3} parent=0 // loop_pre_header
    _
  $region3: #{_downblock_forward_impl.3} parent=0 // loop_header
    %s11 = sphi 0, %s15
    %p12 = scmp.ge.s32.totalorder %s11, 4
    %s21 = sphi 0, %s23
    %s24 = sphi 0, %s21
    %s25 = sphi 0, %s24
    %s41 = sphi 0, %s25
    %s45 = sphi 0, %s45
    %s47 = sphi 0, %s45
    %s48 = sphi 0, %s47
    %s62 = sphi 0, %s48
    %s66 = sphi 0, %s66
    %s68 = sphi 0, %s66
    %s69 = sphi 0, %s68
    %s83 = sphi 0, %s69
    %s89 = sphi 0, %s91
    %s92 = sphi 0, %s89
    %s93 = sphi 0, %s92
    %s109 = sphi 0, %s93
    %s115 = sphi 0, %s117
    %s118 = sphi 0, %s115
    %s119 = sphi 0, %s118
    %s135 = sphi 0, %s119
  $region4: #{_downblock_forward_impl.3} parent=0 // loop_header_branch
    %14 = sbr.rel (%p12) target = $region8
  $region5: #{_downblock_forward_impl.3} parent=0 // loop_body
    %s16 = ssub.s32 %s11, 1
    %s17 = ssub.s32 %s11, 2
    %s18 = sadd.s32 %s11, 1
    %s19 = ssub.s32 %s11, %s18
    %p20 = scmp.eq.s32.totalorder %s19, 0
    %s22 = sadd.s32 %s21, 1
    %s23 = scalar_select %p20, %s21, %s22
    %p26 = pneg %p20
    %p27 = scmp.eq.s32.totalorder %s11, 1
    %p28 = por %p26, %p27
    %p29 = scmp.ne.s32.totalorder %s21, %s24
    %p30 = scmp.eq.s32.totalorder %s11, 0
    %p31 = por %p29, %p30
    %p32 = scmp.ne.s32.totalorder %s21, %s24
    %p33 = scmp.eq.s32.totalorder %s16, 1
    %p34 = por %p32, %p33
    %p35 = scmp.ne.s32.totalorder %s24, %s25
    %p36 = scmp.eq.s32.totalorder %s16, 0
    %p37 = por %p35, %p36
    %p38 = scmp.ne.s32.totalorder %s24, %s25
    %p39 = scmp.eq.s32.totalorder %s17, 1
    %p40 = por %p38, %p39
    %p42 = scmp.ne.s32.totalorder %s25, %s41
    %p43 = scmp.eq.s32.totalorder %s17, 0
    %p44 = por %p42, %p43
    %s46 = sadd.s32 %s45, 1
    %p49 = scmp.eq.s32.totalorder %s11, 1
    %p50 = scmp.ne.s32.totalorder %s45, %s47
    %p51 = scmp.eq.s32.totalorder %s11, 0
    %p52 = por %p50, %p51
    %p53 = scmp.ne.s32.totalorder %s45, %s47
    %p54 = scmp.eq.s32.totalorder %s16, 1
    %p55 = por %p53, %p54
    %p56 = scmp.ne.s32.totalorder %s47, %s48
    %p57 = scmp.eq.s32.totalorder %s16, 0
    %p58 = por %p56, %p57
    %p59 = scmp.ne.s32.totalorder %s47, %s48
    %p60 = scmp.eq.s32.totalorder %s17, 1
    %p61 = por %p59, %p60
    %p63 = scmp.ne.s32.totalorder %s48, %s62
    %p64 = scmp.eq.s32.totalorder %s17, 0
    %p65 = por %p63, %p64
    %s67 = sadd.s32 %s66, 1
    %p70 = scmp.eq.s32.totalorder %s11, 1
    %p71 = scmp.ne.s32.totalorder %s66, %s68
    %p72 = scmp.eq.s32.totalorder %s11, 0
    %p73 = por %p71, %p72
    %p74 = scmp.ne.s32.totalorder %s66, %s68
    %p75 = scmp.eq.s32.totalorder %s16, 1
    %p76 = por %p74, %p75
    %p77 = scmp.ne.s32.totalorder %s68, %s69
    %p78 = scmp.eq.s32.totalorder %s16, 0
    %p79 = por %p77, %p78
    %p80 = scmp.ne.s32.totalorder %s68, %s69
    %p81 = scmp.eq.s32.totalorder %s17, 1
    %p82 = por %p80, %p81
    %p84 = scmp.ne.s32.totalorder %s69, %s83
    %p85 = scmp.eq.s32.totalorder %s17, 0
    %p86 = por %p84, %p85
    %s87 = ssub.s32 %s11, %s18
    %p88 = scmp.eq.s32.totalorder %s87, 0
    %s90 = sadd.s32 %s89, 1
    %s91 = scalar_select %p88, %s89, %s90
    %p94 = pneg %p88
    %p95 = scmp.eq.s32.totalorder %s11, 1
    %p96 = por %p94, %p95
    %p97 = scmp.ne.s32.totalorder %s89, %s92
    %p98 = scmp.eq.s32.totalorder %s11, 0
    %p99 = por %p97, %p98
    %p100 = scmp.ne.s32.totalorder %s89, %s92
    %p101 = scmp.eq.s32.totalorder %s16, 1
    %p102 = por %p100, %p101
    %p103 = scmp.ne.s32.totalorder %s92, %s93
    %p104 = scmp.eq.s32.totalorder %s16, 0
    %p105 = por %p103, %p104
    %p106 = scmp.ne.s32.totalorder %s92, %s93
    %p107 = scmp.eq.s32.totalorder %s17, 1
    %p108 = por %p106, %p107
    %p110 = scmp.ne.s32.totalorder %s93, %s109
    %p111 = scmp.eq.s32.totalorder %s17, 0
    %p112 = por %p110, %p111
    %s113 = ssub.s32 %s11, %s18
    %p114 = scmp.eq.s32.totalorder %s113, 0
    %s116 = sadd.s32 %s115, 1
    %s117 = scalar_select %p114, %s115, %s116
    %p120 = pneg %p114
    %p121 = scmp.eq.s32.totalorder %s11, 1
    %p122 = por %p120, %p121
    %p123 = scmp.ne.s32.totalorder %s115, %s118
    %p124 = scmp.eq.s32.totalorder %s11, 0
    %p125 = por %p123, %p124
    %p126 = scmp.ne.s32.totalorder %s115, %s118
    %p127 = scmp.eq.s32.totalorder %s16, 1
    %p128 = por %p126, %p127
    %p129 = scmp.ne.s32.totalorder %s118, %s119
    %p130 = scmp.eq.s32.totalorder %s16, 0
    %p131 = por %p129, %p130
    %p132 = scmp.ne.s32.totalorder %s118, %s119
    %p133 = scmp.eq.s32.totalorder %s17, 1
    %p134 = por %p132, %p133
    %p136 = scmp.ne.s32.totalorder %s119, %s135
    %p137 = scmp.eq.s32.totalorder %s17, 0
    %p138 = por %p136, %p137
    %p139 = scmp.le.s32.totalorder 1, %s11
    %p140 = scmp.lt.s32.totalorder %s11, 3
    %p141 = pnand %p139, %p140
    %p142 = pneg %p141
    // Predicated region
    $region9: #{_downblock_forward_impl.3} parent=5 // pred_check
      _
    $region10: #{_downblock_forward_impl.3} parent=5 // pred_check_branch
      %144 = sbr.rel (%p141) target = $region12
    $region11: #{_downblock_forward_impl.3} parent=5 // pred_region
      %s145 = ssub.s32 %s11, 1
      // Predicated region
      $region13: #{_downblock_forward_impl.3} parent=11 // pred_check
        %p146 = pneg %p58
      $region14: #{_downblock_forward_impl.3} parent=11 // pred_check_branch
        %148 = sbr.rel (%p146) target = $region16
      $region15: #{_downblock_forward_impl.3} parent=11 // pred_region
        _
      $region16: #{_downblock_forward_impl.3} parent=11 // pred_fallthru
        _
      // Predicated region
      $region17: #{_downblock_forward_impl.3} parent=11 // pred_check
        %p149 = pneg %p79
      $region18: #{_downblock_forward_impl.3} parent=11 // pred_check_branch
        %151 = sbr.rel (%p149) target = $region20
      $region19: #{_downblock_forward_impl.3} parent=11 // pred_region
        _
      $region20: #{_downblock_forward_impl.3} parent=11 // pred_fallthru
        _
    $region12: #{_downblock_forward_impl.3} parent=5 // pred_fallthru
      _
    %p152 = scmp.lt.s32.totalorder %s11, 2
    // Predicated region
    $region21: #{_downblock_forward_impl.3} parent=5 // pred_check
      %p153 = pneg %p152
    $region22: #{_downblock_forward_impl.3} parent=5 // pred_check_branch
      %155 = sbr.rel (%p153) target = $region24
    $region23: #{_downblock_forward_impl.3} parent=5 // pred_region
      // Predicated region
      $region25: #{_downblock_forward_impl.3} parent=23 // pred_check
        %p156 = pneg %p31
      $region26: #{_downblock_forward_impl.3} parent=23 // pred_check_branch
        %158 = sbr.rel (%p156) target = $region28
      $region27: #{_downblock_forward_impl.3} parent=23 // pred_region
        %s159 = smul.u32 8, %s11
        %p160 = scmp.lt.s32.totalorder %s159, 15
        %s161 = scalar_select %p160, %s159, 15
        %s162 = smul.addr %s161, 4
        %s163 = scalar_lea.vmem %s0, %s162
        %s164 = smul.u32 8, %s11
      $region28: #{_downblock_forward_impl.3} parent=23 // pred_fallthru
        _
    $region24: #{_downblock_forward_impl.3} parent=5 // pred_fallthru
      _
    %p165 = scmp.le.s32.totalorder 1, %s11
    %p166 = scmp.lt.s32.totalorder %s11, 3
    %p167 = pnand %p165, %p166
    %p168 = pneg %p167
    // Predicated region
    $region29: #{_downblock_forward_impl.3} parent=5 // pred_check
      _
    $region30: #{_downblock_forward_impl.3} parent=5 // pred_check_branch
      %170 = sbr.rel (%p167) target = $region32
    $region31: #{_downblock_forward_impl.3} parent=5 // pred_region
      %s171 = ssub.s32 %s11, 1
      %s172 = smul.u32 8, %s16
      %p173 = scmp.lt.s32.totalorder %s172, 15
      %s174 = scalar_select %p173, %s172, 15
      %s175 = smul.addr %s174, 4
      %s176 = scalar_lea.vmem %s0, %s175
      %p177 = pneg %p37
      %p178 = pneg %p34
      %p179 = pneg %p58
      %p180 = pneg %p55
      %p181 = pneg %p79
      %p182 = pneg %p76
      %p183 = pneg %p105
      %p184 = pneg %p102
      %s185 = smul.u32 8, %s16
      %p186 = scmp.lt.s32.totalorder %s185, 15
      %s187 = scalar_select %p186, %s185, 15
      %s188 = smul.addr %s187, 4
      %s189 = scalar_lea.vmem %s3, %s188
      %p190 = pneg %p131
      %p191 = pneg %p128
      %p192 = scmp.lt.s32.totalorder %s16, 1
      %s193 = scalar_select %p192, %s16, 1
      %s194 = smul.addr %s193, 8
      %s195 = scalar_lea.vmem %s4, %s194
      %s196 = smul.u32 8, %s16
      %p197 = scmp.lt.s32.totalorder %s196, 15
      %s198 = scalar_select %p197, %s196, 15
      %s199 = smul.addr %s198, 4
      %s200 = scalar_lea.vmem %s0, %s199
      %s201 = smul.u32 8, %s16
      %s202 = smul.u32 8, %s16
      %p203 = scmp.lt.s32.totalorder %s202, 15
      %s204 = scalar_select %p203, %s202, 15
      %s205 = smul.addr %s204, 4
      %s206 = scalar_lea.vmem %s3, %s205
      %s207 = smul.u32 8, %s16
      %p208 = scmp.lt.s32.totalorder %s16, 1
      %s209 = scalar_select %p208, %s16, 1
      %s210 = smul.addr %s209, 8
      %s211 = scalar_lea.vmem %s4, %s210
      %v213 = vld [vmem:[%s200] sm:$0xf]
      %v214 = vld [vmem:[%s200 + $0x4] sm:$0xf]
      %v215 = vld [vmem:[%s200 + $0x8] sm:$0xf]
      %v216 = vld [vmem:[%s200 + $0xc] sm:$0xf]
      %v217 = vld [vmem:[%s200 + $0x10] sm:$0xf]
      %v218 = vld [vmem:[%s200 + $0x14] sm:$0xf]
      %v219 = vld [vmem:[%s200 + $0x18] sm:$0xf]
      %v220 = vld [vmem:[%s200 + $0x1c] sm:$0xf]
      %v221 = vld [vmem:[%s1] sm:$0xf]
      %v222 = vld [vmem:[%s1 + $0x4] sm:$0xf]
      %v223 = vld [vmem:[%s1 + $0x8] sm:$0xf]
      %v224 = vld [vmem:[%s1 + $0xc] sm:$0xf]
      %v225 = vld [vmem:[%s1 + $0x10] sm:$0x3]
      %v226 = vld [vmem:[%s2] sm:$0x1]
      %v228 = vlaneseq
      %v229 = vshrl.u32 %v228, 7
      %v230 = vsub.s32 0, %v229
      %v231 = vrot.slane %v226, %v230
      %v241 = vunpack.c.l.b16 %v213
      %v242 = vunpack.c.l.b16 %v214
      %v243 = vunpack.c.l.b16 %v215
      %v244 = vunpack.c.l.b16 %v216
      %v245 = vunpack.c.l.b16 %v217
      %v246 = vunpack.c.l.b16 %v218
      %v247 = vunpack.c.l.b16 %v219
      %v248 = vunpack.c.l.b16 %v220
      %v249 = vpack.c.b16 %v242, %v241
      %v250 = vpack.c.b16 %v244, %v243
      %v251 = vpack.c.b16 %v246, %v245
      %v252 = vpack.c.b16 %v248, %v247
      %v258 = vunpack.c.l.b16 %v221
      %v259 = vunpack.c.l.b16 %v222
      %v260 = vunpack.c.l.b16 %v223
      %v261 = vunpack.c.l.b16 %v224
      %v262 = vunpack.c.l.b16 %v225
      %v263 = vpack.c.b16 %v259, %v258
      %v264 = vpack.c.b16 %v261, %v260
      %v265 = vpack.c.b16 %v262, %v262
      %vm268 = vcmask 293888
      %v270 = vsel %vm268, %v249, 0
      %v273 = vsel %vm268, %v250, 0
      %v276 = vsel %vm268, %v251, 0
      %v279 = vsel %vm268, %v252, 0
      %vm281 = vcmask 1041408
      %v283 = vsel %vm281, %v265, 0
      %285 = vmatprep.subr.bf16.mxu0 0
      %286 = vmatpush1.bf16.msra.mxu0 0
      %287 = vmatprep.subr.bf16.mxu0 0
      %288 = vmatpush1.bf16.msra.mxu0 0
      %289 = vmatprep.subr.bf16.mxu0 0
      %290 = vmatpush1.bf16.msra.mxu0 0
      %291 = vmatprep.subr.bf16.mxu0 0
      %292 = vmatpush1.bf16.msra.mxu0 0
      %293 = vmatprep.subr.bf16.mxu0 0
      %294 = vmatpush1.bf16.msra.mxu0 0
      %295 = vmatprep.subr.bf16.mxu0 0
      %296 = vmatpush1.bf16.msra.mxu0 %v283
      %297 = vmatprep.subr.bf16.mxu0 0
      %298 = vmatpush1.bf16.msra.mxu0 %v264
      %299 = vmatprep.subr.bf16.mxu0 0
      %300 = vmatpush1.bf16.msra.mxu0 %v263
      %301 = vmatprep.subr.bf16.mxu0 0
      %302 = vmatpush2.bf16.msra.mxu0 0
      %303 = vmatprep.subr.bf16.mxu0 0
      %304 = vmatpush2.bf16.msra.mxu0 0
      %305 = vmatprep.subr.bf16.mxu0 0
      %306 = vmatpush2.bf16.msra.mxu0 0
      %307 = vmatprep.subr.bf16.mxu0 0
      %308 = vmatpush2.bf16.msra.mxu0 0
      %309 = vmatprep.subr.bf16.mxu0 0
      %310 = vmatpush2.bf16.msra.mxu0 0
      %311 = vmatprep.subr.bf16.mxu0 0
      %312 = vmatpush2.bf16.msra.mxu0 0
      %313 = vmatprep.subr.bf16.mxu0 0
      %314 = vmatpush2.bf16.msra.mxu0 0
      %315 = vmatprep.subr.bf16.mxu0 0
      %316 = vmatpush2.bf16.msra.mxu0 0
      %317 = vmatprep.mubr.bf16.mxu0 0
      %318 = vmatmul.mubr.bf16.gmra.mxu0 %v270
      %v319 = vpop.f32.mrf.mxu0
      %v320 = vadd.f32 %v231, %v319
      %v321 = vpop.f32.mrf.mxu0
      %v322 = vpop.f32.mrf.mxu0
      %v323 = vadd.f32 %v231, %v322
      %v324 = vpop.f32.mrf.mxu0
      %325 = vmatprep.mubr.bf16.mxu0 0
      %326 = vmatmul.mubr.bf16.gmra.mxu0 %v273
      %v327 = vpop.f32.mrf.mxu0
      %v328 = vadd.f32 %v231, %v327
      %v329 = vpop.f32.mrf.mxu0
      %v330 = vpop.f32.mrf.mxu0
      %v331 = vadd.f32 %v231, %v330
      %v332 = vpop.f32.mrf.mxu0
      %333 = vmatprep.mubr.bf16.mxu0 0
      %334 = vmatmul.mubr.bf16.gmra.mxu0 %v276
      %v335 = vpop.f32.mrf.mxu0
      %v336 = vadd.f32 %v231, %v335
      %v337 = vpop.f32.mrf.mxu0
      %v338 = vpop.f32.mrf.mxu0
      %v339 = vadd.f32 %v231, %v338
      %v340 = vpop.f32.mrf.mxu0
      %341 = vmatprep.mubr.bf16.mxu0 0
      %342 = vmatmul.mubr.bf16.gmra.mxu0 %v279
      %v343 = vpop.f32.mrf.mxu0
      %v344 = vadd.f32 %v231, %v343
      %v345 = vpop.f32.mrf.mxu0
      %v346 = vpop.f32.mrf.mxu0
      %v347 = vadd.f32 %v231, %v346
      %v348 = vpop.f32.mrf.mxu0
      %349 = vdwg.mxu0
      %v350 = vpack.c.bf16 %v323, %v320
      %v351 = vpack.c.bf16 %v331, %v328
      %v352 = vpack.c.bf16 %v339, %v336
      %v353 = vpack.c.bf16 %v347, %v344
      %v358 = vunpack.c.l.b16 %v350
      %v359 = vunpack.c.h.b16 %v350
      %v360 = vunpack.c.l.b16 %v351
      %v361 = vunpack.c.h.b16 %v351
      %v362 = vunpack.c.l.b16 %v352
      %v363 = vunpack.c.h.b16 %v352
      %v364 = vunpack.c.l.b16 %v353
      %v365 = vunpack.c.h.b16 %v353
      %v366 = vpack.c.b16 %v358, %v358
      %v367 = vpack.c.b16 %v359, %v359
      %v368 = vpack.c.b16 %v360, %v360
      %v369 = vpack.c.b16 %v361, %v361
      %v370 = vpack.c.b16 %v362, %v362
      %v371 = vpack.c.b16 %v363, %v363
      %v372 = vpack.c.b16 %v364, %v364
      %v373 = vpack.c.b16 %v365, %v365
      %vm382 = vcmask 60416
      %383 = vst.msk [vmem:[%s206] sm:$0xf] %vm382, %v366
      %384 = vst.msk [vmem:[%s206 + $0x4] sm:$0xf] %vm382, %v367
      %385 = vst.msk [vmem:[%s206 + $0x8] sm:$0xf] %vm382, %v368
      %386 = vst.msk [vmem:[%s206 + $0xc] sm:$0xf] %vm382, %v369
      %387 = vst.msk [vmem:[%s206 + $0x10] sm:$0xf] %vm382, %v370
      %388 = vst.msk [vmem:[%s206 + $0x14] sm:$0xf] %vm382, %v371
      %389 = vst.msk [vmem:[%s206 + $0x18] sm:$0xf] %vm382, %v372
      %390 = vst.msk [vmem:[%s206 + $0x1c] sm:$0xf] %vm382, %v373
      %s391 = smul.u32 %s16, 64
      %v392 = vlaneseq
      %v393 = vshrl.u32 %v392, 7
      %v394 = vadd.s32 %v393, 8
      %v395 = vadd.s32 %v393, 16
      %v396 = vadd.s32 %v393, 24
      %v397 = vadd.s32 %v393, 32
      %v398 = vadd.s32 %v393, 40
      %v399 = vadd.s32 %v393, 48
      %v400 = vadd.s32 %v393, 56
      %v401 = vstv %s391
      %v402 = vadd.s32 %v393, %v401
      %v403 = vadd.s32 %v394, %v401
      %v404 = vadd.s32 %v395, %v401
      %v405 = vadd.s32 %v396, %v401
      %v406 = vadd.s32 %v397, %v401
      %v407 = vadd.s32 %v398, %v401
      %v408 = vadd.s32 %v399, %v401
      %v409 = vadd.s32 %v400, %v401
      %vm410 = vcmp.lt.s32.totalorder %v402, 128
      %vm411 = vcmp.lt.s32.totalorder %v403, 128
      %vm412 = vcmp.lt.s32.totalorder %v404, 128
      %vm413 = vcmp.lt.s32.totalorder %v405, 128
      %vm414 = vcmp.lt.s32.totalorder %v406, 128
      %vm415 = vcmp.lt.s32.totalorder %v407, 128
      %vm416 = vcmp.lt.s32.totalorder %v408, 128
      %vm417 = vcmp.lt.s32.totalorder %v409, 128
      %v418 = vunpack.c.l.bf16 %v350
      %v419 = vunpack.c.h.bf16 %v350
      %v420 = vunpack.c.l.bf16 %v351
      %v421 = vunpack.c.h.bf16 %v351
      %v422 = vunpack.c.l.bf16 %v352
      %v423 = vunpack.c.h.bf16 %v352
      %v424 = vunpack.c.l.bf16 %v353
      %v425 = vunpack.c.h.bf16 %v353
      %v426 = vsel %vm410, 1, 0
      %v427 = vsel %vm411, 1, 0
      %v428 = vsel %vm412, 1, 0
      %v429 = vsel %vm413, 1, 0
      %v430 = vsel %vm414, 1, 0
      %v431 = vsel %vm415, 1, 0
      %v432 = vsel %vm416, 1, 0
      %v433 = vsel %vm417, 1, 0
      %vm434 = vcmp.eq.s32.totalorder %v426, 1
      %vm435 = vcmp.eq.s32.totalorder %v427, 1
      %vm436 = vcmp.eq.s32.totalorder %v428, 1
      %vm437 = vcmp.eq.s32.totalorder %v429, 1
      %vm438 = vcmp.eq.s32.totalorder %v430, 1
      %vm439 = vcmp.eq.s32.totalorder %v431, 1
      %vm440 = vcmp.eq.s32.totalorder %v432, 1
      %vm441 = vcmp.eq.s32.totalorder %v433, 1
      %v442 = vsel %vm434, %v418, 0.0
      %v443 = vsel %vm435, %v419, 0.0
      %v444 = vsel %vm436, %v420, 0.0
      %v445 = vsel %vm437, %v421, 0.0
      %v446 = vsel %vm438, %v422, 0.0
      %v447 = vsel %vm439, %v423, 0.0
      %v448 = vsel %vm440, %v424, 0.0
      %v449 = vsel %vm441, %v425, 0.0
      %vm450 = vcmask 64512
      %v451 = vsel %vm450, %v442, 0.0
      %v452 = vsel %vm450, %v443, 0.0
      %v453 = vadd.f32 %v451, %v452
      %v454 = vsel %vm450, %v444, 0.0
      %v455 = vadd.f32 %v453, %v454
      %v456 = vsel %vm450, %v445, 0.0
      %v457 = vadd.f32 %v455, %v456
      %v458 = vsel %vm450, %v446, 0.0
      %v459 = vadd.f32 %v457, %v458
      %v460 = vsel %vm450, %v447, 0.0
      %v461 = vadd.f32 %v459, %v460
      %v462 = vsel %vm450, %v448, 0.0
      %v463 = vadd.f32 %v461, %v462
      %v464 = vsel %vm450, %v449, 0.0
      %v465 = vadd.f32 %v463, %v464
      %v466 = vrot.slane %v465, 4
      %v467 = vadd.f32 %v465, %v466
      %v468 = vrot.slane %v467, 2
      %v469 = vadd.f32 %v467, %v468
      %v470 = vrot.slane %v469, 1
      %v471 = vadd.f32 %v469, %v470
      %v472 = vmul.f32 %v442, %v442
      %v473 = vmul.f32 %v443, %v443
      %v474 = vmul.f32 %v444, %v444
      %v475 = vmul.f32 %v445, %v445
      %v476 = vmul.f32 %v446, %v446
      %v477 = vmul.f32 %v447, %v447
      %v478 = vmul.f32 %v448, %v448
      %v479 = vmul.f32 %v449, %v449
      %v480 = vsel %vm450, %v472, 0.0
      %v481 = vsel %vm450, %v473, 0.0
      %v482 = vadd.f32 %v480, %v481
      %v483 = vsel %vm450, %v474, 0.0
      %v484 = vadd.f32 %v482, %v483
      %v485 = vsel %vm450, %v475, 0.0
      %v486 = vadd.f32 %v484, %v485
      %v487 = vsel %vm450, %v476, 0.0
      %v488 = vadd.f32 %v486, %v487
      %v489 = vsel %vm450, %v477, 0.0
      %v490 = vadd.f32 %v488, %v489
      %v491 = vsel %vm450, %v478, 0.0
      %v492 = vadd.f32 %v490, %v491
      %v493 = vsel %vm450, %v479, 0.0
      %v494 = vadd.f32 %v492, %v493
      %v495 = vrot.slane %v494, 4
      %v496 = vadd.f32 %v494, %v495
      %v497 = vrot.slane %v496, 2
      %v498 = vadd.f32 %v496, %v497
      %v499 = vrot.slane %v498, 1
      %v500 = vadd.f32 %v498, %v499
      %vm501 = vcmp.eq.s32.totalorder %v393, 0
      %v502 = vsel %vm501, %v471, %v500
      %503 = vst.msk [vmem:[%s211] sm:$0xff] %vm450, %v502
      %s504 = smul.u32 8, %s16
      %p505 = scmp.lt.s32.totalorder %s504, 15
      %s506 = scalar_select %p505, %s504, 15
      %s507 = smul.addr %s506, 4
      %s508 = scalar_lea.vmem %s3, %s507
      %p509 = scmp.lt.s32.totalorder %s16, 1
      %s510 = scalar_select %p509, %s16, 1
      %s511 = smul.addr %s510, 8
      %s512 = scalar_lea.vmem %s4, %s511
      // Predicated region
      $region33: #{_downblock_forward_impl.3} parent=31 // pred_check
        %p513 = pneg %p102
      $region34: #{_downblock_forward_impl.3} parent=31 // pred_check_branch
        %515 = sbr.rel (%p513) target = $region36
      $region35: #{_downblock_forward_impl.3} parent=31 // pred_region
        %s516 = smul.u32 8, %s16
      $region36: #{_downblock_forward_impl.3} parent=31 // pred_fallthru
        _
      // Predicated region
      $region37: #{_downblock_forward_impl.3} parent=31 // pred_check
        %p517 = pneg %p128
      $region38: #{_downblock_forward_impl.3} parent=31 // pred_check_branch
        %519 = sbr.rel (%p517) target = $region40
      $region39: #{_downblock_forward_impl.3} parent=31 // pred_region
        _
      $region40: #{_downblock_forward_impl.3} parent=31 // pred_fallthru
        _
    $region32: #{_downblock_forward_impl.3} parent=5 // pred_fallthru
      _
    %p520 = scmp.le.s32.totalorder 2, %s11
    // Predicated region
    $region41: #{_downblock_forward_impl.3} parent=5 // pred_check
      %p521 = pneg %p520
    $region42: #{_downblock_forward_impl.3} parent=5 // pred_check_branch
      %523 = sbr.rel (%p521) target = $region44
    $region43: #{_downblock_forward_impl.3} parent=5 // pred_region
      %s524 = ssub.s32 %s11, 2
      // Predicated region
      $region45: #{_downblock_forward_impl.3} parent=43 // pred_check
        %p525 = pneg %p108
      $region46: #{_downblock_forward_impl.3} parent=43 // pred_check_branch
        %527 = sbr.rel (%p525) target = $region48
      $region47: #{_downblock_forward_impl.3} parent=43 // pred_region
        %s528 = smul.u32 8, %s17
        %p529 = scmp.lt.s32.totalorder %s528, 15
        %s530 = scalar_select %p529, %s528, 15
        %s531 = smul.addr %s530, 4
        %s532 = scalar_lea.vmem %s3, %s531
      $region48: #{_downblock_forward_impl.3} parent=43 // pred_fallthru
        _
      // Predicated region
      $region49: #{_downblock_forward_impl.3} parent=43 // pred_check
        %p533 = pneg %p134
      $region50: #{_downblock_forward_impl.3} parent=43 // pred_check_branch
        %535 = sbr.rel (%p533) target = $region52
      $region51: #{_downblock_forward_impl.3} parent=43 // pred_region
        %p536 = scmp.lt.s32.totalorder %s17, 1
        %s537 = scalar_select %p536, %s17, 1
        %s538 = smul.addr %s537, 8
        %s539 = scalar_lea.vmem %s4, %s538
      $region52: #{_downblock_forward_impl.3} parent=43 // pred_fallthru
        _
    $region44: #{_downblock_forward_impl.3} parent=5 // pred_fallthru
      _
  $region6: #{_downblock_forward_impl.3} parent=0 // loop_footer
    %s15 = sadd.s32 1, %s11
  $region7: #{_downblock_forward_impl.3} parent=0 // loop_footer_branch
    %10 = sbr.rel target = $region3
  $region8: #{_downblock_forward_impl.3} parent=0 // loop_exit
    _

// kernel: _downblock_forward_impl.4
$region0: #{_downblock_forward_impl.4}
  #allocation0 [shape = 'u32[]', space=smem, size = 0x4, offset = 0x4, fixed_abs, tag = 'smem constant byte address 0x4 - core index']
  #allocation1 [shape = 'u32[144,128]{1,0:T(1,128)}', space=vmem, size = 0x12000, scoped, tag = 'internal scratch']
  %s0 = inlined_call_operand.vmem [shape: bf16[2,10,10,8], index: 0, kind: input, shape index: {}]
  %s1 = inlined_call_operand.vmem [shape: f32[1,1,8], index: 1, kind: input, shape index: {}]
  %s2 = inlined_call_operand.vmem [shape: f32[1,1,8], index: 2, kind: input, shape index: {}]
  %s3 = inlined_call_operand.vmem [shape: bf16[9,8,8], index: 3, kind: input, shape index: {}]
  %s4 = inlined_call_operand.vmem [shape: f32[1,8], index: 4, kind: input, shape index: {}]
  %s5 = inlined_call_operand.vmem [shape: bf16[2,64,8], index: 5, kind: output, shape index: {0}]
  %s6 = inlined_call_operand.vmem [shape: f32[2,8,8], index: 6, kind: output, shape index: {1}]
  %7 = xla_tuple %s5, %s6
  %s8 = sld [smem:[#allocation0]]
  $region61: #{_downblock_forward_impl.4} parent=0
    _
  %s10 = ssub.s32 1, %s8
  %s11 = scalar_select 0, %s10, %s8
  loop: start=0, step=1, limit=4
  $region2: #{_downblock_forward_impl.4} parent=0 // loop_pre_header
    _
  $region3: #{_downblock_forward_impl.4} parent=0 // loop_header
    %s13 = sphi 0, %s17
    %p14 = scmp.ge.s32.totalorder %s13, 4
    %s23 = sphi 0, %s25
    %s26 = sphi 0, %s23
    %s27 = sphi 0, %s26
    %s43 = sphi 0, %s27
    %s47 = sphi 0, %s47
    %s49 = sphi 0, %s47
    %s50 = sphi 0, %s49
    %s64 = sphi 0, %s50
    %s68 = sphi 0, %s68
    %s70 = sphi 0, %s68
    %s71 = sphi 0, %s70
    %s85 = sphi 0, %s71
    %s89 = sphi 0, %s89
    %s91 = sphi 0, %s89
    %s92 = sphi 0, %s91
    %s106 = sphi 0, %s92
    %s110 = sphi 0, %s110
    %s112 = sphi 0, %s110
    %s113 = sphi 0, %s112
    %s127 = sphi 0, %s113
    %s133 = sphi 0, %s135
    %s136 = sphi 0, %s133
    %s137 = sphi 0, %s136
    %s153 = sphi 0, %s137
    %s159 = sphi 0, %s161
    %s162 = sphi 0, %s159
    %s163 = sphi 0, %s162
    %s179 = sphi 0, %s163
  $region4: #{_downblock_forward_impl.4} parent=0 // loop_header_branch
    %16 = sbr.rel (%p14) target = $region8
  $region5: #{_downblock_forward_impl.4} parent=0 // loop_body
    %s18 = ssub.s32 %s13, 1
    %s19 = ssub.s32 %s13, 2
    %s20 = sadd.s32 %s13, 1
    %s21 = ssub.s32 %s13, %s20
    %p22 = scmp.eq.s32.totalorder %s21, 0
    %s24 = sadd.s32 %s23, 1
    %s25 = scalar_select %p22, %s23, %s24
    %p28 = pneg %p22
    %p29 = scmp.eq.s32.totalorder %s13, 1
    %p30 = por %p28, %p29
    %p31 = scmp.ne.s32.totalorder %s23, %s26
    %p32 = scmp.eq.s32.totalorder %s13, 0
    %p33 = por %p31, %p32
    %p34 = scmp.ne.s32.totalorder %s23, %s26
    %p35 = scmp.eq.s32.totalorder %s18, 1
    %p36 = por %p34, %p35
    %p37 = scmp.ne.s32.totalorder %s26, %s27
    %p38 = scmp.eq.s32.totalorder %s18, 0
    %p39 = por %p37, %p38
    %p40 = scmp.ne.s32.totalorder %s26, %s27
    %p41 = scmp.eq.s32.totalorder %s19, 1
    %p42 = por %p40, %p41
    %p44 = scmp.ne.s32.totalorder %s27, %s43
    %p45 = scmp.eq.s32.totalorder %s19, 0
    %p46 = por %p44, %p45
    %s48 = sadd.s32 %s47, 1
    %p51 = scmp.eq.s32.totalorder %s13, 1
    %p52 = scmp.ne.s32.totalorder %s47, %s49
    %p53 = scmp.eq.s32.totalorder %s13, 0
    %p54 = por %p52, %p53
    %p55 = scmp.ne.s32.totalorder %s47, %s49
    %p56 = scmp.eq.s32.totalorder %s18, 1
    %p57 = por %p55, %p56
    %p58 = scmp.ne.s32.totalorder %s49, %s50
    %p59 = scmp.eq.s32.totalorder %s18, 0
    %p60 = por %p58, %p59
    %p61 = scmp.ne.s32.totalorder %s49, %s50
    %p62 = scmp.eq.s32.totalorder %s19, 1
    %p63 = por %p61, %p62
    %p65 = scmp.ne.s32.totalorder %s50, %s64
    %p66 = scmp.eq.s32.totalorder %s19, 0
    %p67 = por %p65, %p66
    %s69 = sadd.s32 %s68, 1
    %p72 = scmp.eq.s32.totalorder %s13, 1
    %p73 = scmp.ne.s32.totalorder %s68, %s70
    %p74 = scmp.eq.s32.totalorder %s13, 0
    %p75 = por %p73, %p74
    %p76 = scmp.ne.s32.totalorder %s68, %s70
    %p77 = scmp.eq.s32.totalorder %s18, 1
    %p78 = por %p76, %p77
    %p79 = scmp.ne.s32.totalorder %s70, %s71
    %p80 = scmp.eq.s32.totalorder %s18, 0
    %p81 = por %p79, %p80
    %p82 = scmp.ne.s32.totalorder %s70, %s71
    %p83 = scmp.eq.s32.totalorder %s19, 1
    %p84 = por %p82, %p83
    %p86 = scmp.ne.s32.totalorder %s71, %s85
    %p87 = scmp.eq.s32.totalorder %s19, 0
    %p88 = por %p86, %p87
    %s90 = sadd.s32 %s89, 1
    %p93 = scmp.eq.s32.totalorder %s13, 1
    %p94 = scmp.ne.s32.totalorder %s89, %s91
    %p95 = scmp.eq.s32.totalorder %s13, 0
    %p96 = por %p94, %p95
    %p97 = scmp.ne.s32.totalorder %s89, %s91
    %p98 = scmp.eq.s32.totalorder %s18, 1
    %p99 = por %p97, %p98
    %p100 = scmp.ne.s32.totalorder %s91, %s92
    %p101 = scmp.eq.s32.totalorder %s18, 0
    %p102 = por %p100, %p101
    %p103 = scmp.ne.s32.totalorder %s91, %s92
    %p104 = scmp.eq.s32.totalorder %s19, 1
    %p105 = por %p103, %p104
    %p107 = scmp.ne.s32.totalorder %s92, %s106
    %p108 = scmp.eq.s32.totalorder %s19, 0
    %p109 = por %p107, %p108
    %s111 = sadd.s32 %s110, 1
    %p114 = scmp.eq.s32.totalorder %s13, 1
    %p115 = scmp.ne.s32.totalorder %s110, %s112
    %p116 = scmp.eq.s32.totalorder %s13, 0
    %p117 = por %p115, %p116
    %p118 = scmp.ne.s32.totalorder %s110, %s112
    %p119 = scmp.eq.s32.totalorder %s18, 1
    %p120 = por %p118, %p119
    %p121 = scmp.ne.s32.totalorder %s112, %s113
    %p122 = scmp.eq.s32.totalorder %s18, 0
    %p123 = por %p121, %p122
    %p124 = scmp.ne.s32.totalorder %s112, %s113
    %p125 = scmp.eq.s32.totalorder %s19, 1
    %p126 = por %p124, %p125
    %p128 = scmp.ne.s32.totalorder %s113, %s127
    %p129 = scmp.eq.s32.totalorder %s19, 0
    %p130 = por %p128, %p129
    %s131 = ssub.s32 %s13, %s20
    %p132 = scmp.eq.s32.totalorder %s131, 0
    %s134 = sadd.s32 %s133, 1
    %s135 = scalar_select %p132, %s133, %s134
    %p138 = pneg %p132
    %p139 = scmp.eq.s32.totalorder %s13, 1
    %p140 = por %p138, %p139
    %p141 = scmp.ne.s32.totalorder %s133, %s136
    %p142 = scmp.eq.s32.totalorder %s13, 0
    %p143 = por %p141, %p142
    %p144 = scmp.ne.s32.totalorder %s133, %s136
    %p145 = scmp.eq.s32.totalorder %s18, 1
    %p146 = por %p144, %p145
    %p147 = scmp.ne.s32.totalorder %s136, %s137
    %p148 = scmp.eq.s32.totalorder %s18, 0
    %p149 = por %p147, %p148
    %p150 = scmp.ne.s32.totalorder %s136, %s137
    %p151 = scmp.eq.s32.totalorder %s19, 1
    %p152 = por %p150, %p151
    %p154 = scmp.ne.s32.totalorder %s137, %s153
    %p155 = scmp.eq.s32.totalorder %s19, 0
    %p156 = por %p154, %p155
    %s157 = ssub.s32 %s13, %s20
    %p158 = scmp.eq.s32.totalorder %s157, 0
    %s160 = sadd.s32 %s159, 1
    %s161 = scalar_select %p158, %s159, %s160
    %p164 = pneg %p158
    %p165 = scmp.eq.s32.totalorder %s13, 1
    %p166 = por %p164, %p165
    %p167 = scmp.ne.s32.totalorder %s159, %s162
    %p168 = scmp.eq.s32.totalorder %s13, 0
    %p169 = por %p167, %p168
    %p170 = scmp.ne.s32.totalorder %s159, %s162
    %p171 = scmp.eq.s32.totalorder %s18, 1
    %p172 = por %p170, %p171
    %p173 = scmp.ne.s32.totalorder %s162, %s163
    %p174 = scmp.eq.s32.totalorder %s18, 0
    %p175 = por %p173, %p174
    %p176 = scmp.ne.s32.totalorder %s162, %s163
    %p177 = scmp.eq.s32.totalorder %s19, 1
    %p178 = por %p176, %p177
    %p180 = scmp.ne.s32.totalorder %s163, %s179
    %p181 = scmp.eq.s32.totalorder %s19, 0
    %p182 = por %p180, %p181
    %p183 = scmp.le.s32.totalorder 1, %s13
    %p184 = scmp.lt.s32.totalorder %s13, 3
    %p185 = pnand %p183, %p184
    %p186 = pneg %p185
    // Predicated region
    $region9: #{_downblock_forward_impl.4} parent=5 // pred_check
      _
    $region10: #{_downblock_forward_impl.4} parent=5 // pred_check_branch
      %188 = sbr.rel (%p185) target = $region12
    $region11: #{_downblock_forward_impl.4} parent=5 // pred_region
      %s189 = ssub.s32 %s13, 1
      // Predicated region
      $region13: #{_downblock_forward_impl.4} parent=11 // pred_check
        %p190 = pneg %p60
      $region14: #{_downblock_forward_impl.4} parent=11 // pred_check_branch
        %192 = sbr.rel (%p190) target = $region16
      $region15: #{_downblock_forward_impl.4} parent=11 // pred_region
        _
      $region16: #{_downblock_forward_impl.4} parent=11 // pred_fallthru
        _
      // Predicated region
      $region17: #{_downblock_forward_impl.4} parent=11 // pred_check
        %p193 = pneg %p81
      $region18: #{_downblock_forward_impl.4} parent=11 // pred_check_branch
        %195 = sbr.rel (%p193) target = $region20
      $region19: #{_downblock_forward_impl.4} parent=11 // pred_region
        _
      $region20: #{_downblock_forward_impl.4} parent=11 // pred_fallthru
        _
      // Predicated region
      $region21: #{_downblock_forward_impl.4} parent=11 // pred_check
        %p196 = pneg %p102
      $region22: #{_downblock_forward_impl.4} parent=11 // pred_check_branch
        %198 = sbr.rel (%p196) target = $region24
      $region23: #{_downblock_forward_impl.4} parent=11 // pred_region
        _
      $region24: #{_downblock_forward_impl.4} parent=11 // pred_fallthru
        _
      // Predicated region
      $region25: #{_downblock_forward_impl.4} parent=11 // pred_check
        %p199 = pneg %p123
      $region26: #{_downblock_forward_impl.4} parent=11 // pred_check_branch
        %201 = sbr.rel (%p199) target = $region28
      $region27: #{_downblock_forward_impl.4} parent=11 // pred_region
        _
      $region28: #{_downblock_forward_impl.4} parent=11 // pred_fallthru
        _
    $region12: #{_downblock_forward_impl.4} parent=5 // pred_fallthru
      _
    %p202 = scmp.lt.s32.totalorder %s13, 2
    // Predicated region
    $region29: #{_downblock_forward_impl.4} parent=5 // pred_check
      %p203 = pneg %p202
    $region30: #{_downblock_forward_impl.4} parent=5 // pred_check_branch
      %205 = sbr.rel (%p203) target = $region32
    $region31: #{_downblock_forward_impl.4} parent=5 // pred_region
      // Predicated region
      $region33: #{_downblock_forward_impl.4} parent=31 // pred_check
        %p206 = pneg %p33
      $region34: #{_downblock_forward_impl.4} parent=31 // pred_check_branch
        %208 = sbr.rel (%p206) target = $region36
      $region35: #{_downblock_forward_impl.4} parent=31 // pred_region
        %p209 = scmp.lt.s32.totalorder %s13, 1
        %s210 = scalar_select %p209, %s13, 1
        %s211 = smul.addr %s210, 20
        %s212 = smul.addr %s211, 4
        %s213 = scalar_lea.vmem %s0, %s212
      $region36: #{_downblock_forward_impl.4} parent=31 // pred_fallthru
        _
    $region32: #{_downblock_forward_impl.4} parent=5 // pred_fallthru
      _
    %p214 = scmp.le.s32.totalorder 1, %s13
    %p215 = scmp.lt.s32.totalorder %s13, 3
    %p216 = pnand %p214, %p215
    %p217 = pneg %p216
    // Predicated region
    $region37: #{_downblock_forward_impl.4} parent=5 // pred_check
      _
    $region38: #{_downblock_forward_impl.4} parent=5 // pred_check_branch
      %219 = sbr.rel (%p216) target = $region40
    $region39: #{_downblock_forward_impl.4} parent=5 // pred_region
      %s220 = ssub.s32 %s13, 1
      %p221 = scmp.lt.s32.totalorder %s18, 1
      %s222 = scalar_select %p221, %s18, 1
      %s223 = smul.addr %s222, 20
      %s224 = smul.addr %s223, 4
      %s225 = scalar_lea.vmem %s0, %s224
      %p226 = pneg %p39
      %p227 = pneg %p36
      %p228 = pneg %p60
      %p229 = pneg %p57
      %p230 = pneg %p81
      %p231 = pneg %p78
      %p232 = pneg %p102
      %p233 = pneg %p99
      %p234 = pneg %p123
      %p235 = pneg %p120
      %p236 = pneg %p149
      %p237 = pneg %p146
      %p238 = scmp.lt.s32.totalorder %s18, 1
      %s239 = scalar_select %p238, %s18, 1
      %s240 = smul.addr %s239, 8
      %s241 = smul.addr %s240, 4
      %s242 = scalar_lea.vmem %s5, %s241
      %p243 = pneg %p175
      %p244 = pneg %p172
      %p245 = scmp.lt.s32.totalorder %s18, 1
      %s246 = scalar_select %p245, %s18, 1
      %s247 = smul.addr %s246, 8
      %s248 = scalar_lea.vmem %s6, %s247
      %p249 = scmp.lt.s32.totalorder %s18, 1
      %s250 = scalar_select %p249, %s18, 1
      %s251 = smul.addr %s250, 20
      %s252 = smul.addr %s251, 4
      %s253 = scalar_lea.vmem %s0, %s252
      %p254 = scmp.lt.s32.totalorder %s18, 1
      %s255 = scalar_select %p254, %s18, 1
      %s256 = smul.addr %s255, 8
      %s257 = smul.addr %s256, 4
      %s258 = scalar_lea.vmem %s5, %s257
      %p259 = scmp.lt.s32.totalorder %s18, 1
      %s260 = scalar_select %p259, %s18, 1
      %s261 = smul.addr %s260, 8
      %s262 = scalar_lea.vmem %s6, %s261
      %v264 = vld [vmem:[%s253] sm:$0xf]
      %v265 = vld [vmem:[%s253 + $0x4] sm:$0x1]
      %v266 = vld [vmem:[%s253 + $0x8] sm:$0xf]
      %v267 = vld [vmem:[%s253 + $0xc] sm:$0x1]
      %v268 = vld [vmem:[%s253 + $0x10] sm:$0xf]
      %v269 = vld [vmem:[%s253 + $0x14] sm:$0x1]
      %v270 = vld [vmem:[%s253 + $0x18] sm:$0xf]
      %v271 = vld [vmem:[%s253 + $0x1c] sm:$0x1]
      %v272 = vld [vmem:[%s253 + $0x20] sm:$0xf]
      %v273 = vld [vmem:[%s253 + $0x24] sm:$0x1]
      %v274 = vld [vmem:[%s253 + $0x28] sm:$0xf]
      %v275 = vld [vmem:[%s253 + $0x2c] sm:$0x1]
      %v276 = vld [vmem:[%s253 + $0x30] sm:$0xf]
      %v277 = vld [vmem:[%s253 + $0x34] sm:$0x1]
      %v278 = vld [vmem:[%s253 + $0x38] sm:$0xf]
      %v279 = vld [vmem:[%s253 + $0x3c] sm:$0x1]
      %v280 = vld [vmem:[%s253 + $0x40] sm:$0xf]
      %v281 = vld [vmem:[%s253 + $0x44] sm:$0x1]
      %v282 = vld [vmem:[%s253 + $0x48] sm:$0xf]
      %v283 = vld [vmem:[%s253 + $0x4c] sm:$0x1]
      %v284 = vunpack.c.l.bf16 %v264
      %v285 = vunpack.c.l.bf16 %v265
      %v286 = vunpack.c.l.bf16 %v266
      %v287 = vunpack.c.l.bf16 %v267
      %v288 = vunpack.c.l.bf16 %v268
      %v289 = vunpack.c.l.bf16 %v269
      %v290 = vunpack.c.l.bf16 %v270
      %v291 = vunpack.c.l.bf16 %v271
      %v292 = vunpack.c.l.bf16 %v272
      %v293 = vunpack.c.l.bf16 %v273
      %v294 = vunpack.c.l.bf16 %v274
      %v295 = vunpack.c.l.bf16 %v275
      %v296 = vunpack.c.l.bf16 %v276
      %v297 = vunpack.c.l.bf16 %v277
      %v298 = vunpack.c.l.bf16 %v278
      %v299 = vunpack.c.l.bf16 %v279
      %v300 = vunpack.c.l.bf16 %v280
      %v301 = vunpack.c.l.bf16 %v281
      %v302 = vunpack.c.l.bf16 %v282
      %v303 = vunpack.c.l.bf16 %v283
      %v304 = vld [vmem:[%s1] sm:$0x1]
      %v306 = vlaneseq
      %v307 = vshrl.u32 %v306, 7
      %v308 = vsub.s32 0, %v307
      %v309 = vrot.slane %v304, %v308
      %v311 = vmul.f32 %v284, %v309
      %v312 = vmul.f32 %v285, %v309
      %v313 = vmul.f32 %v286, %v309
      %v314 = vmul.f32 %v287, %v309
      %v315 = vmul.f32 %v288, %v309
      %v316 = vmul.f32 %v289, %v309
      %v317 = vmul.f32 %v290, %v309
      %v318 = vmul.f32 %v291, %v309
      %v319 = vmul.f32 %v292, %v309
      %v320 = vmul.f32 %v293, %v309
      %v321 = vmul.f32 %v294, %v309
      %v322 = vmul.f32 %v295, %v309
      %v323 = vmul.f32 %v296, %v309
      %v324 = vmul.f32 %v297, %v309
      %v325 = vmul.f32 %v298, %v309
      %v326 = vmul.f32 %v299, %v309
      %v327 = vmul.f32 %v300, %v309
      %v328 = vmul.f32 %v301, %v309
      %v329 = vmul.f32 %v302, %v309
      %v330 = vmul.f32 %v303, %v309
      %v331 = vld [vmem:[%s2] sm:$0x1]
      %v333 = vlaneseq
      %v334 = vshrl.u32 %v333, 7
      %v335 = vsub.s32 0, %v334
      %v336 = vrot.slane %v331, %v335
      %v338 = vadd.f32 %v311, %v336
      %v339 = vadd.f32 %v312, %v336
      %v340 = vadd.f32 %v313, %v336
      %v341 = vadd.f32 %v314, %v336
      %v342 = vadd.f32 %v315, %v336
      %v343 = vadd.f32 %v316, %v336
      %v344 = vadd.f32 %v317, %v336
      %v345 = vadd.f32 %v318, %v336
      %v346 = vadd.f32 %v319, %v336
      %v347 = vadd.f32 %v320, %v336
      %v348 = vadd.f32 %v321, %v336
      %v349 = vadd.f32 %v322, %v336
      %v350 = vadd.f32 %v323, %v336
      %v351 = vadd.f32 %v324, %v336
      %v352 = vadd.f32 %v325, %v336
      %v353 = vadd.f32 %v326, %v336
      %v354 = vadd.f32 %v327, %v336
      %v355 = vadd.f32 %v328, %v336
      %v356 = vadd.f32 %v329, %v336
      %v357 = vadd.f32 %v330, %v336
      %v358 = vmax.f32 %v338, 0.0
      %v359 = vmax.f32 %v339, 0.0
      %v360 = vmax.f32 %v340, 0.0
      %v361 = vmax.f32 %v341, 0.0
      %v362 = vmax.f32 %v342, 0.0
      %v363 = vmax.f32 %v343, 0.0
      %v364 = vmax.f32 %v344, 0.0
      %v365 = vmax.f32 %v345, 0.0
      %v366 = vmax.f32 %v346, 0.0
      %v367 = vmax.f32 %v347, 0.0
      %v368 = vmax.f32 %v348, 0.0
      %v369 = vmax.f32 %v349, 0.0
      %v370 = vmax.f32 %v350, 0.0
      %v371 = vmax.f32 %v351, 0.0
      %v372 = vmax.f32 %v352, 0.0
      %v373 = vmax.f32 %v353, 0.0
      %v374 = vmax.f32 %v354, 0.0
      %v375 = vmax.f32 %v355, 0.0
      %v376 = vmax.f32 %v356, 0.0
      %v377 = vmax.f32 %v357, 0.0
      %v378 = vlaneseq
      %v379 = vshrl.u32 %v378, 7
      %v380 = vadd.s32 %v379, 8
      %vm381 = vcmp.ge.s32.totalorder %v379, 1
      %vm382 = vcmp.ge.s32.totalorder %v380, 1
      %vm383 = vmand 0, %vm381
      %vm384 = vmand 0, %vm382
      %vm385 = vmand 1, %vm381
      %vm386 = vmand 1, %vm382
      %vm387 = vcmp.le.s32.totalorder %v379, 8
      %vm388 = vcmp.le.s32.totalorder %v380, 8
      %vm389 = vmand %vm383, %vm387
      %vm390 = vmand %vm384, %vm388
      %vm391 = vmand %vm385, %vm387
      %vm392 = vmand %vm386, %vm388
      %v393 = vsel %vm389, %v358, 0.0
      %v394 = vsel %vm390, %v359, 0.0
      %v395 = vsel %vm391, %v360, 0.0
      %v396 = vsel %vm392, %v361, 0.0
      %v397 = vsel %vm391, %v362, 0.0
      %v398 = vsel %vm392, %v363, 0.0
      %v399 = vsel %vm391, %v364, 0.0
      %v400 = vsel %vm392, %v365, 0.0
      %v401 = vsel %vm391, %v366, 0.0
      %v402 = vsel %vm392, %v367, 0.0
      %v403 = vsel %vm391, %v368, 0.0
      %v404 = vsel %vm392, %v369, 0.0
      %v405 = vsel %vm391, %v370, 0.0
      %v406 = vsel %vm392, %v371, 0.0
      %v407 = vsel %vm391, %v372, 0.0
      %v408 = vsel %vm392, %v373, 0.0
      %v409 = vsel %vm391, %v374, 0.0
      %v410 = vsel %vm392, %v375, 0.0
      %v411 = vsel %vm389, %v376, 0.0
      %v412 = vsel %vm390, %v377, 0.0
      %v413 = vpack.c.bf16 %v394, %v393
      %v414 = vpack.c.bf16 %v396, %v395
      %v415 = vpack.c.bf16 %v398, %v397
      %v416 = vpack.c.bf16 %v400, %v399
      %v417 = vpack.c.bf16 %v402, %v401
      %v418 = vpack.c.bf16 %v404, %v403
      %v419 = vpack.c.bf16 %v406, %v405
      %v420 = vpack.c.bf16 %v408, %v407
      %v421 = vpack.c.bf16 %v410, %v409
      %v422 = vpack.c.bf16 %v412, %v411
      %v423 = vld [vmem:[%s3] sm:$0xf]
      %v432 = vunpack.c.l.b16 %v413
      %v433 = vunpack.c.h.b16 %v413
      %v434 = vunpack.c.l.b16 %v414
      %v435 = vunpack.c.h.b16 %v414
      %v436 = vunpack.c.l.b16 %v415
      %v437 = vunpack.c.h.b16 %v415
      %v438 = vunpack.c.l.b16 %v416
      %v439 = vunpack.c.h.b16 %v416
      %v440 = vunpack.c.l.b16 %v417
      %v441 = vunpack.c.h.b16 %v417
      %v442 = vunpack.c.l.b16 %v418
      %v443 = vunpack.c.h.b16 %v418
      %v444 = vunpack.c.l.b16 %v419
      %v445 = vunpack.c.h.b16 %v419
      %v446 = vunpack.c.l.b16 %v420
      %v447 = vunpack.c.h.b16 %v420
      %v448 = vpack.c.b16 %v432, %v432
      %v449 = vpack.c.b16 %v433, %v433
      %v450 = vpack.c.b16 %v434, %v434
      %v451 = vpack.c.b16 %v435, %v435
      %v452 = vpack.c.b16 %v436, %v436
      %v453 = vpack.c.b16 %v437, %v437
      %v454 = vpack.c.b16 %v438, %v438
      %v455 = vpack.c.b16 %v439, %v439
      %v456 = vpack.c.b16 %v440, %v440
      %v457 = vpack.c.b16 %v441, %v441
      %v458 = vpack.c.b16 %v442, %v442
      %v459 = vpack.c.b16 %v443, %v443
      %v460 = vpack.c.b16 %v444, %v444
      %v461 = vpack.c.b16 %v445, %v445
      %v462 = vpack.c.b16 %v446, %v446
      %v463 = vpack.c.b16 %v447, %v447
      %vm464 = vsmask.f32 3328
      %vm465 = vsmask.f32 7440
      %vm466 = vmor %vm464, %vm465
      %v468 = vshrl.u32 %v448, 16
      %v470 = vrot.slane %v468, 4
      %v471 = vshll.u32 %v448, 16
      %v473 = vrot.slane %v471, 5
      %v474 = vor.u32 %v470, %v473
      %v475 = vrot.slane %v474, 4
      %v477 = vshll.u32 %v449, 16
      %v479 = vrot.slane %v477, 5
      %v480 = vsel %vm466, %v475, %v479
      %v482 = vshrl.u32 %v450, 16
      %v484 = vrot.slane %v482, 4
      %v485 = vshll.u32 %v450, 16
      %v487 = vrot.slane %v485, 5
      %v488 = vor.u32 %v484, %v487
      %v489 = vrot.slane %v488, 4
      %v491 = vshll.u32 %v451, 16
      %v493 = vrot.slane %v491, 5
      %v494 = vsel %vm466, %v489, %v493
      %v496 = vshrl.u32 %v452, 16
      %v498 = vrot.slane %v496, 4
      %v499 = vshll.u32 %v452, 16
      %v501 = vrot.slane %v499, 5
      %v502 = vor.u32 %v498, %v501
      %v503 = vrot.slane %v502, 4
      %v505 = vshll.u32 %v453, 16
      %v507 = vrot.slane %v505, 5
      %v508 = vsel %vm466, %v503, %v507
      %v510 = vshrl.u32 %v454, 16
      %v512 = vrot.slane %v510, 4
      %v513 = vshll.u32 %v454, 16
      %v515 = vrot.slane %v513, 5
      %v516 = vor.u32 %v512, %v515
      %v517 = vrot.slane %v516, 4
      %v519 = vshll.u32 %v455, 16
      %v521 = vrot.slane %v519, 5
      %v522 = vsel %vm466, %v517, %v521
      %v524 = vshrl.u32 %v456, 16
      %v526 = vrot.slane %v524, 4
      %v527 = vshll.u32 %v456, 16
      %v529 = vrot.slane %v527, 5
      %v530 = vor.u32 %v526, %v529
      %v531 = vrot.slane %v530, 4
      %v533 = vshll.u32 %v457, 16
      %v535 = vrot.slane %v533, 5
      %v536 = vsel %vm466, %v531, %v535
      %v538 = vshrl.u32 %v458, 16
      %v540 = vrot.slane %v538, 4
      %v541 = vshll.u32 %v458, 16
      %v543 = vrot.slane %v541, 5
      %v544 = vor.u32 %v540, %v543
      %v545 = vrot.slane %v544, 4
      %v547 = vshll.u32 %v459, 16
      %v549 = vrot.slane %v547, 5
      %v550 = vsel %vm466, %v545, %v549
      %v552 = vshrl.u32 %v460, 16
      %v554 = vrot.slane %v552, 4
      %v555 = vshll.u32 %v460, 16
      %v557 = vrot.slane %v555, 5
      %v558 = vor.u32 %v554, %v557
      %v559 = vrot.slane %v558, 4
      %v561 = vshll.u32 %v461, 16
      %v563 = vrot.slane %v561, 5
      %v564 = vsel %vm466, %v559, %v563
      %v566 = vshrl.u32 %v462, 16
      %v568 = vrot.slane %v566, 4
      %v569 = vshll.u32 %v462, 16
      %v571 = vrot.slane %v569, 5
      %v572 = vor.u32 %v568, %v571
      %v573 = vrot.slane %v572, 4
      %v575 = vshll.u32 %v463, 16
      %v577 = vrot.slane %v575, 5
      %v578 = vsel %vm466, %v573, %v577
      %s579 = scalar_lea.vmem %s3, 4
      %v580 = vld [vmem:[%s579] sm:$0xf]
      %v581 = vunpack.c.l.b16 %v480
      %v582 = vunpack.c.l.b16 %v494
      %v583 = vunpack.c.l.b16 %v508
      %v584 = vunpack.c.l.b16 %v522
      %v585 = vunpack.c.l.b16 %v536
      %v586 = vunpack.c.l.b16 %v550
      %v587 = vunpack.c.l.b16 %v564
      %v588 = vunpack.c.l.b16 %v578
      %v589 = vpack.c.b16 %v582, %v581
      %v590 = vpack.c.b16 %v584, %v583
      %v591 = vpack.c.b16 %v586, %v585
      %v592 = vpack.c.b16 %v588, %v587
      %vm593 = vcmask 64512
      %v595 = vsel %vm593, %v589, 0
      %v598 = vsel %vm593, %v590, 0
      %v601 = vsel %vm593, %v591, 0
      %v604 = vsel %vm593, %v592, 0
      %vm606 = vcmask 1043456
      %v608 = vsel %vm606, %v580, 0
      %610 = vmatprep.subr.bf16.mxu0 0
      %611 = vmatpush1.bf16.msra.mxu0 0
      %612 = vmatprep.subr.bf16.mxu0 0
      %613 = vmatpush1.bf16.msra.mxu0 0
      %614 = vmatprep.subr.bf16.mxu0 0
      %615 = vmatpush1.bf16.msra.mxu0 0
      %616 = vmatprep.subr.bf16.mxu0 0
      %617 = vmatpush1.bf16.msra.mxu0 0
      %618 = vmatprep.subr.bf16.mxu0 0
      %619 = vmatpush1.bf16.msra.mxu0 0
      %620 = vmatprep.subr.bf16.mxu0 0
      %621 = vmatpush1.bf16.msra.mxu0 0
      %622 = vmatprep.subr.bf16.mxu0 0
      %623 = vmatpush1.bf16.msra.mxu0 0
      %624 = vmatprep.subr.bf16.mxu0 0
      %625 = vmatpush1.bf16.msra.mxu0 %v608
      %626 = vmatprep.subr.bf16.mxu0 0
      %627 = vmatpush2.bf16.msra.mxu0 0
      %628 = vmatprep.subr.bf16.mxu0 0
      %629 = vmatpush2.bf16.msra.mxu0 0
      %630 = vmatprep.subr.bf16.mxu0 0
      %631 = vmatpush2.bf16.msra.mxu0 0
      %632 = vmatprep.subr.bf16.mxu0 0
      %633 = vmatpush2.bf16.msra.mxu0 0
      %634 = vmatprep.subr.bf16.mxu0 0
      %635 = vmatpush2.bf16.msra.mxu0 0
      %636 = vmatprep.subr.bf16.mxu0 0
      %637 = vmatpush2.bf16.msra.mxu0 0
      %638 = vmatprep.subr.bf16.mxu0 0
      %639 = vmatpush2.bf16.msra.mxu0 0
      %640 = vmatprep.subr.bf16.mxu0 0
      %641 = vmatpush2.bf16.msra.mxu0 0
      %642 = vmatprep.mubr.bf16.mxu0 0
      %643 = vmatmul.mubr.bf16.gmra.mxu0 %v595
      %v644 = vpop.f32.mrf.mxu0
      %v645 = vadd.f32 0.0, %v644
      %v646 = vpop.f32.mrf.mxu0
      %v647 = vpop.f32.mrf.mxu0
      %v648 = vadd.f32 0.0, %v647
      %v649 = vpop.f32.mrf.mxu0
      %650 = vmatprep.mubr.bf16.mxu0 0
      %651 = vmatmul.mubr.bf16.gmra.mxu0 %v598
      %v652 = vpop.f32.mrf.mxu0
      %v653 = vadd.f32 0.0, %v652
      %v654 = vpop.f32.mrf.mxu0
      %v655 = vpop.f32.mrf.mxu0
      %v656 = vadd.f32 0.0, %v655
      %v657 = vpop.f32.mrf.mxu0
      %658 = vmatprep.mubr.bf16.mxu0 0
      %659 = vmatmul.mubr.bf16.gmra.mxu0 %v601
      %v660 = vpop.f32.mrf.mxu0
      %v661 = vadd.f32 0.0, %v660
      %v662 = vpop.f32.mrf.mxu0
      %v663 = vpop.f32.mrf.mxu0
      %v664 = vadd.f32 0.0, %v663
      %v665 = vpop.f32.mrf.mxu0
      %666 = vmatprep.mubr.bf16.mxu0 0
      %667 = vmatmul.mubr.bf16.gmra.mxu0 %v604
      %v668 = vpop.f32.mrf.mxu0
      %v669 = vadd.f32 0.0, %v668
      %v670 = vpop.f32.mrf.mxu0
      %v671 = vpop.f32.mrf.mxu0
      %v672 = vadd.f32 0.0, %v671
      %v673 = vpop.f32.mrf.mxu0
      %674 = vdwg.mxu0
      %v675 = vpack.c.b16 %v434, %v432
      %v676 = vpack.c.b16 %v438, %v436
      %v677 = vpack.c.b16 %v442, %v440
      %v678 = vpack.c.b16 %v446, %v444
      %v680 = vsel %vm593, %v675, 0
      %v683 = vsel %vm593, %v676, 0
      %v686 = vsel %vm593, %v677, 0
      %v689 = vsel %vm593, %v678, 0
      %v692 = vsel %vm606, %v423, 0
      %694 = vmatprep.subr.bf16.mxu0 0
      %695 = vmatpush1.bf16.msra.mxu0 0
      %696 = vmatprep.subr.bf16.mxu0 0
      %697 = vmatpush1.bf16.msra.mxu0 0
      %698 = vmatprep.subr.bf16.mxu0 0
      %699 = vmatpush1.bf16.msra.mxu0 0
      %700 = vmatprep.subr.bf16.mxu0 0
      %701 = vmatpush1.bf16.msra.mxu0 0
      %702 = vmatprep.subr.bf16.mxu0 0
      %703 = vmatpush1.bf16.msra.mxu0 0
      %704 = vmatprep.subr.bf16.mxu0 0
      %705 = vmatpush1.bf16.msra.mxu0 0
      %706 = vmatprep.subr.bf16.mxu0 0
      %707 = vmatpush1.bf16.msra.mxu0 0
      %708 = vmatprep.subr.bf16.mxu0 0
      %709 = vmatpush1.bf16.msra.mxu0 %v692
      %710 = vmatprep.subr.bf16.mxu0 0
      %711 = vmatpush2.bf16.msra.mxu0 0
      %712 = vmatprep.subr.bf16.mxu0 0
      %713 = vmatpush2.bf16.msra.mxu0 0
      %714 = vmatprep.subr.bf16.mxu0 0
      %715 = vmatpush2.bf16.msra.mxu0 0
      %716 = vmatprep.subr.bf16.mxu0 0
      %717 = vmatpush2.bf16.msra.mxu0 0
      %718 = vmatprep.subr.bf16.mxu0 0
      %719 = vmatpush2.bf16.msra.mxu0 0
      %720 = vmatprep.subr.bf16.mxu0 0
      %721 = vmatpush2.bf16.msra.mxu0 0
      %722 = vmatprep.subr.bf16.mxu0 0
      %723 = vmatpush2.bf16.msra.mxu0 0
      %724 = vmatprep.subr.bf16.mxu0 0
      %725 = vmatpush2.bf16.msra.mxu0 0
      %726 = vmatprep.mubr.bf16.mxu0 0
      %727 = vmatmul.mubr.bf16.gmra.mxu0 %v680
      %v728 = vpop.f32.mrf.mxu0
      %v729 = vadd.f32 %v645, %v728
      %v730 = vpop.f32.mrf.mxu0
      %v731 = vpop.f32.mrf.mxu0
      %v732 = vadd.f32 %v648, %v731
      %v733 = vpop.f32.mrf.mxu0
      %734 = vmatprep.mubr.bf16.mxu0 0
      %735 = vmatmul.mubr.bf16.gmra.mxu0 %v683
      %v736 = vpop.f32.mrf.mxu0
      %v737 = vadd.f32 %v653, %v736
      %v738 = vpop.f32.mrf.mxu0
      %v739 = vpop.f32.mrf.mxu0
      %v740 = vadd.f32 %v656, %v739
      %v741 = vpop.f32.mrf.mxu0
      %742 = vmatprep.mubr.bf16.mxu0 0
      %743 = vmatmul.mubr.bf16.gmra.mxu0 %v686
      %v744 = vpop.f32.mrf.mxu0
      %v745 = vadd.f32 %v661, %v744
      %v746 = vpop.f32.mrf.mxu0
      %v747 = vpop.f32.mrf.mxu0
      %v748 = vadd.f32 %v664, %v747
      %v749 = vpop.f32.mrf.mxu0
      %750 = vmatprep.mubr.bf16.mxu0 0
      %751 = vmatmul.mubr.bf16.gmra.mxu0 %v689
      %v752 = vpop.f32.mrf.mxu0
      %v753 = vadd.f32 %v669, %v752
      %v754 = vpop.f32.mrf.mxu0
      %v755 = vpop.f32.mrf.mxu0
      %v756 = vadd.f32 %v672, %v755
      %v757 = vpop.f32.mrf.mxu0
      %758 = vdwg.mxu0
      %vm759 = vcmask 1042432
      %vm760 = vcmask 1046532
      %vm761 = vmor %vm759, %vm760
      %v762 = vrot.slane %v448, 5
      %v763 = vrot.slane %v762, 4
      %v764 = vrot.slane %v449, 5
      %v765 = vsel %vm761, %v763, %v764
      %v766 = vrot.slane %v450, 5
      %v767 = vrot.slane %v766, 4
      %v768 = vrot.slane %v451, 5
      %v769 = vsel %vm761, %v767, %v768
      %v770 = vrot.slane %v452, 5
      %v771 = vrot.slane %v770, 4
      %v772 = vrot.slane %v453, 5
      %v773 = vsel %vm761, %v771, %v772
      %v774 = vrot.slane %v454, 5
      %v775 = vrot.slane %v774, 4
      %v776 = vrot.slane %v455, 5
      %v777 = vsel %vm761, %v775, %v776
      %v778 = vrot.slane %v456, 5
      %v779 = vrot.slane %v778, 4
      %v780 = vrot.slane %v457, 5
      %v781 = vsel %vm761, %v779, %v780
      %v782 = vrot.slane %v458, 5
      %v783 = vrot.slane %v782, 4
      %v784 = vrot.slane %v459, 5
      %v785 = vsel %vm761, %v783, %v784
      %v786 = vrot.slane %v460, 5
      %v787 = vrot.slane %v786, 4
      %v788 = vrot.slane %v461, 5
      %v789 = vsel %vm761, %v787, %v788
      %v790 = vrot.slane %v462, 5
      %v791 = vrot.slane %v790, 4
      %v792 = vrot.slane %v463, 5
      %v793 = vsel %vm761, %v791, %v792
      %s794 = scalar_lea.vmem %s3, 8
      %v795 = vld [vmem:[%s794] sm:$0xf]
      %v796 = vunpack.c.l.b16 %v765
      %v797 = vunpack.c.l.b16 %v769
      %v798 = vunpack.c.l.b16 %v773
      %v799 = vunpack.c.l.b16 %v777
      %v800 = vunpack.c.l.b16 %v781
      %v801 = vunpack.c.l.b16 %v785
      %v802 = vunpack.c.l.b16 %v789
      %v803 = vunpack.c.l.b16 %v793
      %v804 = vpack.c.b16 %v797, %v796
      %v805 = vpack.c.b16 %v799, %v798
      %v806 = vpack.c.b16 %v801, %v800
      %v807 = vpack.c.b16 %v803, %v802
      %v809 = vsel %vm593, %v804, 0
      %v812 = vsel %vm593, %v805, 0
      %v815 = vsel %vm593, %v806, 0
      %v818 = vsel %vm593, %v807, 0
      %v821 = vsel %vm606, %v795, 0
      %823 = vmatprep.subr.bf16.mxu0 0
      %824 = vmatpush1.bf16.msra.mxu0 0
      %825 = vmatprep.subr.bf16.mxu0 0
      %826 = vmatpush1.bf16.msra.mxu0 0
      %827 = vmatprep.subr.bf16.mxu0 0
      %828 = vmatpush1.bf16.msra.mxu0 0
      %829 = vmatprep.subr.bf16.mxu0 0
      %830 = vmatpush1.bf16.msra.mxu0 0
      %831 = vmatprep.subr.bf16.mxu0 0
      %832 = vmatpush1.bf16.msra.mxu0 0
      %833 = vmatprep.subr.bf16.mxu0 0
      %834 = vmatpush1.bf16.msra.mxu0 0
      %835 = vmatprep.subr.bf16.mxu0 0
      %836 = vmatpush1.bf16.msra.mxu0 0
      %837 = vmatprep.subr.bf16.mxu0 0
      %838 = vmatpush1.bf16.msra.mxu0 %v821
      %839 = vmatprep.subr.bf16.mxu0 0
      %840 = vmatpush2.bf16.msra.mxu0 0
      %841 = vmatprep.subr.bf16.mxu0 0
      %842 = vmatpush2.bf16.msra.mxu0 0
      %843 = vmatprep.subr.bf16.mxu0 0
      %844 = vmatpush2.bf16.msra.mxu0 0
      %845 = vmatprep.subr.bf16.mxu0 0
      %846 = vmatpush2.bf16.msra.mxu0 0
      %847 = vmatprep.subr.bf16.mxu0 0
      %848 = vmatpush2.bf16.msra.mxu0 0
      %849 = vmatprep.subr.bf16.mxu0 0
      %850 = vmatpush2.bf16.msra.mxu0 0
      %851 = vmatprep.subr.bf16.mxu0 0
      %852 = vmatpush2.bf16.msra.mxu0 0
      %853 = vmatprep.subr.bf16.mxu0 0
      %854 = vmatpush2.bf16.msra.mxu0 0
      %855 = vmatprep.mubr.bf16.mxu0 0
      %856 = vmatmul.mubr.bf16.gmra.mxu0 %v809
      %v857 = vpop.f32.mrf.mxu0
      %v858 = vadd.f32 0.0, %v857
      %v859 = vpop.f32.mrf.mxu0
      %v860 = vpop.f32.mrf.mxu0
      %v861 = vadd.f32 0.0, %v860
      %v862 = vpop.f32.mrf.mxu0
      %863 = vmatprep.mubr.bf16.mxu0 0
      %864 = vmatmul.mubr.bf16.gmra.mxu0 %v812
      %v865 = vpop.f32.mrf.mxu0
      %v866 = vadd.f32 0.0, %v865
      %v867 = vpop.f32.mrf.mxu0
      %v868 = vpop.f32.mrf.mxu0
      %v869 = vadd.f32 0.0, %v868
      %v870 = vpop.f32.mrf.mxu0
      %871 = vmatprep.mubr.bf16.mxu0 0
      %872 = vmatmul.mubr.bf16.gmra.mxu0 %v815
      %v873 = vpop.f32.mrf.mxu0
      %v874 = vadd.f32 0.0, %v873
      %v875 = vpop.f32.mrf.mxu0
      %v876 = vpop.f32.mrf.mxu0
      %v877 = vadd.f32 0.0, %v876
      %v878 = vpop.f32.mrf.mxu0
      %879 = vmatprep.mubr.bf16.mxu0 0
      %880 = vmatmul.mubr.bf16.gmra.mxu0 %v818
      %v881 = vpop.f32.mrf.mxu0
      %v882 = vadd.f32 0.0, %v881
      %v883 = vpop.f32.mrf.mxu0
      %v884 = vpop.f32.mrf.mxu0
      %v885 = vadd.f32 0.0, %v884
      %v886 = vpop.f32.mrf.mxu0
      %887 = vdwg.mxu0
      %v888 = vadd.f32 %v729, %v858
      %v889 = vadd.f32 %v732, %v861
      %v890 = vadd.f32 %v737, %v866
      %v891 = vadd.f32 %v740, %v869
      %v892 = vadd.f32 %v745, %v874
      %v893 = vadd.f32 %v748, %v877
      %v894 = vadd.f32 %v753, %v882
      %v895 = vadd.f32 %v756, %v885
      %s896 = scalar_lea.vmem %s3, 12
      %v897 = vld [vmem:[%s896] sm:$0xf]
      %v899 = vunpack.c.l.b16 %v421
      %v900 = vpack.c.b16 %v436, %v434
      %v901 = vpack.c.b16 %v440, %v438
      %v902 = vpack.c.b16 %v444, %v442
      %v903 = vpack.c.b16 %v899, %v446
      %v905 = vsel %vm593, %v900, 0
      %v908 = vsel %vm593, %v901, 0
      %v911 = vsel %vm593, %v902, 0
      %v914 = vsel %vm593, %v903, 0
      %v917 = vsel %vm606, %v897, 0
      %919 = vmatprep.subr.bf16.mxu0 0
      %920 = vmatpush1.bf16.msra.mxu0 0
      %921 = vmatprep.subr.bf16.mxu0 0
      %922 = vmatpush1.bf16.msra.mxu0 0
      %923 = vmatprep.subr.bf16.mxu0 0
      %924 = vmatpush1.bf16.msra.mxu0 0
      %925 = vmatprep.subr.bf16.mxu0 0
      %926 = vmatpush1.bf16.msra.mxu0 0
      %927 = vmatprep.subr.bf16.mxu0 0
      %928 = vmatpush1.bf16.msra.mxu0 0
      %929 = vmatprep.subr.bf16.mxu0 0
      %930 = vmatpush1.bf16.msra.mxu0 0
      %931 = vmatprep.subr.bf16.mxu0 0
      %932 = vmatpush1.bf16.msra.mxu0 0
      %933 = vmatprep.subr.bf16.mxu0 0
      %934 = vmatpush1.bf16.msra.mxu0 %v917
      %935 = vmatprep.subr.bf16.mxu0 0
      %936 = vmatpush2.bf16.msra.mxu0 0
      %937 = vmatprep.subr.bf16.mxu0 0
      %938 = vmatpush2.bf16.msra.mxu0 0
      %939 = vmatprep.subr.bf16.mxu0 0
      %940 = vmatpush2.bf16.msra.mxu0 0
      %941 = vmatprep.subr.bf16.mxu0 0
      %942 = vmatpush2.bf16.msra.mxu0 0
      %943 = vmatprep.subr.bf16.mxu0 0
      %944 = vmatpush2.bf16.msra.mxu0 0
      %945 = vmatprep.subr.bf16.mxu0 0
      %946 = vmatpush2.bf16.msra.mxu0 0
      %947 = vmatprep.subr.bf16.mxu0 0
      %948 = vmatpush2.bf16.msra.mxu0 0
      %949 = vmatprep.subr.bf16.mxu0 0
      %950 = vmatpush2.bf16.msra.mxu0 0
      %951 = vmatprep.mubr.bf16.mxu0 0
      %952 = vmatmul.mubr.bf16.gmra.mxu0 %v905
      %v953 = vpop.f32.mrf.mxu0
      %v954 = vadd.f32 0.0, %v953
      %v955 = vpop.f32.mrf.mxu0
      %v956 = vpop.f32.mrf.mxu0
      %v957 = vadd.f32 0.0, %v956
      %v958 = vpop.f32.mrf.mxu0
      %959 = vmatprep.mubr.bf16.mxu0 0
      %960 = vmatmul.mubr.bf16.gmra.mxu0 %v908
      %v961 = vpop.f32.mrf.mxu0
      %v962 = vadd.f32 0.0, %v961
      %v963 = vpop.f32.mrf.mxu0
      %v964 = vpop.f32.mrf.mxu0
      %v965 = vadd.f32 0.0, %v964
      %v966 = vpop.f32.mrf.mxu0
      %967 = vmatprep.mubr.bf16.mxu0 0
      %968 = vmatmul.mubr.bf16.gmra.mxu0 %v911
      %v969 = vpop.f32.mrf.mxu0
      %v970 = vadd.f32 0.0, %v969
      %v971 = vpop.f32.mrf.mxu0
      %v972 = vpop.f32.mrf.mxu0
      %v973 = vadd.f32 0.0, %v972
      %v974 = vpop.f32.mrf.mxu0
      %975 = vmatprep.mubr.bf16.mxu0 0
      %976 = vmatmul.mubr.bf16.gmra.mxu0 %v914
      %v977 = vpop.f32.mrf.mxu0
      %v978 = vadd.f32 0.0, %v977
      %v979 = vpop.f32.mrf.mxu0
      %v980 = vpop.f32.mrf.mxu0
      %v981 = vadd.f32 0.0, %v980
      %v982 = vpop.f32.mrf.mxu0
      %983 = vdwg.mxu0
      %v984 = vadd.f32 %v888, %v954
      %v985 = vadd.f32 %v889, %v957
      %v986 = vadd.f32 %v890, %v962
      %v987 = vadd.f32 %v891, %v965
      %v988 = vadd.f32 %v892, %v970
      %v989 = vadd.f32 %v893, %v973
      %v990 = vadd.f32 %v894, %v978
      %v991 = vadd.f32 %v895, %v981
      %v992 = vunpack.c.h.b16 %v421
      %v993 = vpack.c.b16 %v899, %v899
      %v994 = vpack.c.b16 %v992, %v992
      %v996 = vshrl.u32 %v993, 16
      %v998 = vrot.slane %v996, 4
      %v999 = vshll.u32 %v993, 16
      %v1001 = vrot.slane %v999, 5
      %v1002 = vor.u32 %v998, %v1001
      %v1003 = vrot.slane %v1002, 4
      %v1005 = vshll.u32 %v994, 16
      %v1007 = vrot.slane %v1005, 5
      %v1008 = vsel %vm466, %v1003, %v1007
      %s1009 = scalar_lea.vmem %s3, 16
      %v1010 = vld [vmem:[%s1009] sm:$0xf]
      %v1011 = vunpack.c.l.b16 %v1008
      %v1012 = vpack.c.b16 %v583, %v582
      %v1013 = vpack.c.b16 %v585, %v584
      %v1014 = vpack.c.b16 %v587, %v586
      %v1015 = vpack.c.b16 %v1011, %v588
      %v1017 = vsel %vm593, %v1012, 0
      %v1020 = vsel %vm593, %v1013, 0
      %v1023 = vsel %vm593, %v1014, 0
      %v1026 = vsel %vm593, %v1015, 0
      %v1029 = vsel %vm606, %v1010, 0
      %1031 = vmatprep.subr.bf16.mxu0 0
      %1032 = vmatpush1.bf16.msra.mxu0 0
      %1033 = vmatprep.subr.bf16.mxu0 0
      %1034 = vmatpush1.bf16.msra.mxu0 0
      %1035 = vmatprep.subr.bf16.mxu0 0
      %1036 = vmatpush1.bf16.msra.mxu0 0
      %1037 = vmatprep.subr.bf16.mxu0 0
      %1038 = vmatpush1.bf16.msra.mxu0 0
      %1039 = vmatprep.subr.bf16.mxu0 0
      %1040 = vmatpush1.bf16.msra.mxu0 0
      %1041 = vmatprep.subr.bf16.mxu0 0
      %1042 = vmatpush1.bf16.msra.mxu0 0
      %1043 = vmatprep.subr.bf16.mxu0 0
      %1044 = vmatpush1.bf16.msra.mxu0 0
      %1045 = vmatprep.subr.bf16.mxu0 0
      %1046 = vmatpush1.bf16.msra.mxu0 %v1029
      %1047 = vmatprep.subr.bf16.mxu0 0
      %1048 = vmatpush2.bf16.msra.mxu0 0
      %1049 = vmatprep.subr.bf16.mxu0 0
      %1050 = vmatpush2.bf16.msra.mxu0 0
      %1051 = vmatprep.subr.bf16.mxu0 0
      %1052 = vmatpush2.bf16.msra.mxu0 0
      %1053 = vmatprep.subr.bf16.mxu0 0
      %1054 = vmatpush2.bf16.msra.mxu0 0
      %1055 = vmatprep.subr.bf16.mxu0 0
      %1056 = vmatpush2.bf16.msra.mxu0 0
      %1057 = vmatprep.subr.bf16.mxu0 0
      %1058 = vmatpush2.bf16.msra.mxu0 0
      %1059 = vmatprep.subr.bf16.mxu0 0
      %1060 = vmatpush2.bf16.msra.mxu0 0
      %1061 = vmatprep.subr.bf16.mxu0 0
      %1062 = vmatpush2.bf16.msra.mxu0 0
      %1063 = vmatprep.mubr.bf16.mxu0 0
      %1064 = vmatmul.mubr.bf16.gmra.mxu0 %v1017
      %v1065 = vpop.f32.mrf.mxu0
      %v1066 = vadd.f32 0.0, %v1065
      %v1067 = vpop.f32.mrf.mxu0
      %v1068 = vpop.f32.mrf.mxu0
      %v1069 = vadd.f32 0.0, %v1068
      %v1070 = vpop.f32.mrf.mxu0
      %1071 = vmatprep.mubr.bf16.mxu0 0
      %1072 = vmatmul.mubr.bf16.gmra.mxu0 %v1020
      %v1073 = vpop.f32.mrf.mxu0
      %v1074 = vadd.f32 0.0, %v1073
      %v1075 = vpop.f32.mrf.mxu0
      %v1076 = vpop.f32.mrf.mxu0
      %v1077 = vadd.f32 0.0, %v1076
      %v1078 = vpop.f32.mrf.mxu0
      %1079 = vmatprep.mubr.bf16.mxu0 0
      %1080 = vmatmul.mubr.bf16.gmra.mxu0 %v1023
      %v1081 = vpop.f32.mrf.mxu0
      %v1082 = vadd.f32 0.0, %v1081
      %v1083 = vpop.f32.mrf.mxu0
      %v1084 = vpop.f32.mrf.mxu0
      %v1085 = vadd.f32 0.0, %v1084
      %v1086 = vpop.f32.mrf.mxu0
      %1087 = vmatprep.mubr.bf16.mxu0 0
      %1088 = vmatmul.mubr.bf16.gmra.mxu0 %v1026
      %v1089 = vpop.f32.mrf.mxu0
      %v1090 = vadd.f32 0.0, %v1089
      %v1091 = vpop.f32.mrf.mxu0
      %v1092 = vpop.f32.mrf.mxu0
      %v1093 = vadd.f32 0.0, %v1092
      %v1094 = vpop.f32.mrf.mxu0
      %1095 = vdwg.mxu0
      %v1096 = vadd.f32 %v984, %v1066
      %v1097 = vadd.f32 %v985, %v1069
      %v1098 = vadd.f32 %v986, %v1074
      %v1099 = vadd.f32 %v987, %v1077
      %v1100 = vadd.f32 %v988, %v1082
      %v1101 = vadd.f32 %v989, %v1085
      %v1102 = vadd.f32 %v990, %v1090
      %v1103 = vadd.f32 %v991, %v1093
      %v1104 = vrot.slane %v993, 5
      %v1105 = vrot.slane %v1104, 4
      %v1106 = vrot.slane %v994, 5
      %v1107 = vsel %vm761, %v1105, %v1106
      %s1108 = scalar_lea.vmem %s3, 20
      %v1109 = vld [vmem:[%s1108] sm:$0xf]
      %v1110 = vunpack.c.l.b16 %v1107
      %v1111 = vpack.c.b16 %v798, %v797
      %v1112 = vpack.c.b16 %v800, %v799
      %v1113 = vpack.c.b16 %v802, %v801
      %v1114 = vpack.c.b16 %v1110, %v803
      %v1116 = vsel %vm593, %v1111, 0
      %v1119 = vsel %vm593, %v1112, 0
      %v1122 = vsel %vm593, %v1113, 0
      %v1125 = vsel %vm593, %v1114, 0
      %v1128 = vsel %vm606, %v1109, 0
      %1130 = vmatprep.subr.bf16.mxu0 0
      %1131 = vmatpush1.bf16.msra.mxu0 0
      %1132 = vmatprep.subr.bf16.mxu0 0
      %1133 = vmatpush1.bf16.msra.mxu0 0
      %1134 = vmatprep.subr.bf16.mxu0 0
      %1135 = vmatpush1.bf16.msra.mxu0 0
      %1136 = vmatprep.subr.bf16.mxu0 0
      %1137 = vmatpush1.bf16.msra.mxu0 0
      %1138 = vmatprep.subr.bf16.mxu0 0
      %1139 = vmatpush1.bf16.msra.mxu0 0
      %1140 = vmatprep.subr.bf16.mxu0 0
      %1141 = vmatpush1.bf16.msra.mxu0 0
      %1142 = vmatprep.subr.bf16.mxu0 0
      %1143 = vmatpush1.bf16.msra.mxu0 0
      %1144 = vmatprep.subr.bf16.mxu0 0
      %1145 = vmatpush1.bf16.msra.mxu0 %v1128
      %1146 = vmatprep.subr.bf16.mxu0 0
      %1147 = vmatpush2.bf16.msra.mxu0 0
      %1148 = vmatprep.subr.bf16.mxu0 0
      %1149 = vmatpush2.bf16.msra.mxu0 0
      %1150 = vmatprep.subr.bf16.mxu0 0
      %1151 = vmatpush2.bf16.msra.mxu0 0
      %1152 = vmatprep.subr.bf16.mxu0 0
      %1153 = vmatpush2.bf16.msra.mxu0 0
      %1154 = vmatprep.subr.bf16.mxu0 0
      %1155 = vmatpush2.bf16.msra.mxu0 0
      %1156 = vmatprep.subr.bf16.mxu0 0
      %1157 = vmatpush2.bf16.msra.mxu0 0
      %1158 = vmatprep.subr.bf16.mxu0 0
      %1159 = vmatpush2.bf16.msra.mxu0 0
      %1160 = vmatprep.subr.bf16.mxu0 0
      %1161 = vmatpush2.bf16.msra.mxu0 0
      %1162 = vmatprep.mubr.bf16.mxu0 0
      %1163 = vmatmul.mubr.bf16.gmra.mxu0 %v1116
      %v1164 = vpop.f32.mrf.mxu0
      %v1165 = vadd.f32 0.0, %v1164
      %v1166 = vpop.f32.mrf.mxu0
      %v1167 = vpop.f32.mrf.mxu0
      %v1168 = vadd.f32 0.0, %v1167
      %v1169 = vpop.f32.mrf.mxu0
      %1170 = vmatprep.mubr.bf16.mxu0 0
      %1171 = vmatmul.mubr.bf16.gmra.mxu0 %v1119
      %v1172 = vpop.f32.mrf.mxu0
      %v1173 = vadd.f32 0.0, %v1172
      %v1174 = vpop.f32.mrf.mxu0
      %v1175 = vpop.f32.mrf.mxu0
      %v1176 = vadd.f32 0.0, %v1175
      %v1177 = vpop.f32.mrf.mxu0
      %1178 = vmatprep.mubr.bf16.mxu0 0
      %1179 = vmatmul.mubr.bf16.gmra.mxu0 %v1122
      %v1180 = vpop.f32.mrf.mxu0
      %v1181 = vadd.f32 0.0, %v1180
      %v1182 = vpop.f32.mrf.mxu0
      %v1183 = vpop.f32.mrf.mxu0
      %v1184 = vadd.f32 0.0, %v1183
      %v1185 = vpop.f32.mrf.mxu0
      %1186 = vmatprep.mubr.bf16.mxu0 0
      %1187 = vmatmul.mubr.bf16.gmra.mxu0 %v1125
      %v1188 = vpop.f32.mrf.mxu0
      %v1189 = vadd.f32 0.0, %v1188
      %v1190 = vpop.f32.mrf.mxu0
      %v1191 = vpop.f32.mrf.mxu0
      %v1192 = vadd.f32 0.0, %v1191
      %v1193 = vpop.f32.mrf.mxu0
      %1194 = vdwg.mxu0
      %v1195 = vadd.f32 %v1096, %v1165
      %v1196 = vadd.f32 %v1097, %v1168
      %v1197 = vadd.f32 %v1098, %v1173
      %v1198 = vadd.f32 %v1099, %v1176
      %v1199 = vadd.f32 %v1100, %v1181
      %v1200 = vadd.f32 %v1101, %v1184
      %v1201 = vadd.f32 %v1102, %v1189
      %v1202 = vadd.f32 %v1103, %v1192
      %s1203 = scalar_lea.vmem %s3, 24
      %v1204 = vld [vmem:[%s1203] sm:$0xf]
      %v1206 = vunpack.c.l.b16 %v422
      %v1207 = vpack.c.b16 %v1206, %v899
      %v1209 = vsel %vm593, %v1207, 0
      %v1212 = vsel %vm606, %v1204, 0
      %1214 = vmatprep.subr.bf16.mxu0 0
      %1215 = vmatpush1.bf16.msra.mxu0 0
      %1216 = vmatprep.subr.bf16.mxu0 0
      %1217 = vmatpush1.bf16.msra.mxu0 0
      %1218 = vmatprep.subr.bf16.mxu0 0
      %1219 = vmatpush1.bf16.msra.mxu0 0
      %1220 = vmatprep.subr.bf16.mxu0 0
      %1221 = vmatpush1.bf16.msra.mxu0 0
      %1222 = vmatprep.subr.bf16.mxu0 0
      %1223 = vmatpush1.bf16.msra.mxu0 0
      %1224 = vmatprep.subr.bf16.mxu0 0
      %1225 = vmatpush1.bf16.msra.mxu0 0
      %1226 = vmatprep.subr.bf16.mxu0 0
      %1227 = vmatpush1.bf16.msra.mxu0 0
      %1228 = vmatprep.subr.bf16.mxu0 0
      %1229 = vmatpush1.bf16.msra.mxu0 %v1212
      %1230 = vmatprep.subr.bf16.mxu0 0
      %1231 = vmatpush2.bf16.msra.mxu0 0
      %1232 = vmatprep.subr.bf16.mxu0 0
      %1233 = vmatpush2.bf16.msra.mxu0 0
      %1234 = vmatprep.subr.bf16.mxu0 0
      %1235 = vmatpush2.bf16.msra.mxu0 0
      %1236 = vmatprep.subr.bf16.mxu0 0
      %1237 = vmatpush2.bf16.msra.mxu0 0
      %1238 = vmatprep.subr.bf16.mxu0 0
      %1239 = vmatpush2.bf16.msra.mxu0 0
      %1240 = vmatprep.subr.bf16.mxu0 0
      %1241 = vmatpush2.bf16.msra.mxu0 0
      %1242 = vmatprep.subr.bf16.mxu0 0
      %1243 = vmatpush2.bf16.msra.mxu0 0
      %1244 = vmatprep.subr.bf16.mxu0 0
      %1245 = vmatpush2.bf16.msra.mxu0 0
      %1246 = vmatprep.mubr.bf16.mxu0 0
      %1247 = vmatmul.mubr.bf16.gmra.mxu0 %v683
      %v1248 = vpop.f32.mrf.mxu0
      %v1249 = vadd.f32 0.0, %v1248
      %v1250 = vpop.f32.mrf.mxu0
      %v1251 = vpop.f32.mrf.mxu0
      %v1252 = vadd.f32 0.0, %v1251
      %v1253 = vpop.f32.mrf.mxu0
      %1254 = vmatprep.mubr.bf16.mxu0 0
      %1255 = vmatmul.mubr.bf16.gmra.mxu0 %v686
      %v1256 = vpop.f32.mrf.mxu0
      %v1257 = vadd.f32 0.0, %v1256
      %v1258 = vpop.f32.mrf.mxu0
      %v1259 = vpop.f32.mrf.mxu0
      %v1260 = vadd.f32 0.0, %v1259
      %v1261 = vpop.f32.mrf.mxu0
      %1262 = vmatprep.mubr.bf16.mxu0 0
      %1263 = vmatmul.mubr.bf16.gmra.mxu0 %v689
      %v1264 = vpop.f32.mrf.mxu0
      %v1265 = vadd.f32 0.0, %v1264
      %v1266 = vpop.f32.mrf.mxu0
      %v1267 = vpop.f32.mrf.mxu0
      %v1268 = vadd.f32 0.0, %v1267
      %v1269 = vpop.f32.mrf.mxu0
      %1270 = vmatprep.mubr.bf16.mxu0 0
      %1271 = vmatmul.mubr.bf16.gmra.mxu0 %v1209
      %v1272 = vpop.f32.mrf.mxu0
      %v1273 = vadd.f32 0.0, %v1272
      %v1274 = vpop.f32.mrf.mxu0
      %v1275 = vpop.f32.mrf.mxu0
      %v1276 = vadd.f32 0.0, %v1275
      %v1277 = vpop.f32.mrf.mxu0
      %1278 = vdwg.mxu0
      %v1279 = vadd.f32 %v1195, %v1249
      %v1280 = vadd.f32 %v1196, %v1252
      %v1281 = vadd.f32 %v1197, %v1257
      %v1282 = vadd.f32 %v1198, %v1260
      %v1283 = vadd.f32 %v1199, %v1265
      %v1284 = vadd.f32 %v1200, %v1268
      %v1285 = vadd.f32 %v1201, %v1273
      %v1286 = vadd.f32 %v1202, %v1276
      %v1287 = vunpack.c.h.b16 %v422
      %v1288 = vpack.c.b16 %v1206, %v1206
      %v1289 = vpack.c.b16 %v1287, %v1287
      %v1291 = vshrl.u32 %v1288, 16
      %v1293 = vrot.slane %v1291, 4
      %v1294 = vshll.u32 %v1288, 16
      %v1296 = vrot.slane %v1294, 5
      %v1297 = vor.u32 %v1293, %v1296
      %v1298 = vrot.slane %v1297, 4
      %v1300 = vshll.u32 %v1289, 16
      %v1302 = vrot.slane %v1300, 5
      %v1303 = vsel %vm466, %v1298, %v1302
      %s1304 = scalar_lea.vmem %s3, 28
      %v1305 = vld [vmem:[%s1304] sm:$0xf]
      %v1306 = vunpack.c.l.b16 %v1303
      %v1307 = vpack.c.b16 %v1306, %v1011
      %v1309 = vsel %vm593, %v1307, 0
      %v1312 = vsel %vm606, %v1305, 0
      %1314 = vmatprep.subr.bf16.mxu0 0
      %1315 = vmatpush1.bf16.msra.mxu0 0
      %1316 = vmatprep.subr.bf16.mxu0 0
      %1317 = vmatpush1.bf16.msra.mxu0 0
      %1318 = vmatprep.subr.bf16.mxu0 0
      %1319 = vmatpush1.bf16.msra.mxu0 0
      %1320 = vmatprep.subr.bf16.mxu0 0
      %1321 = vmatpush1.bf16.msra.mxu0 0
      %1322 = vmatprep.subr.bf16.mxu0 0
      %1323 = vmatpush1.bf16.msra.mxu0 0
      %1324 = vmatprep.subr.bf16.mxu0 0
      %1325 = vmatpush1.bf16.msra.mxu0 0
      %1326 = vmatprep.subr.bf16.mxu0 0
      %1327 = vmatpush1.bf16.msra.mxu0 0
      %1328 = vmatprep.subr.bf16.mxu0 0
      %1329 = vmatpush1.bf16.msra.mxu0 %v1312
      %1330 = vmatprep.subr.bf16.mxu0 0
      %1331 = vmatpush2.bf16.msra.mxu0 0
      %1332 = vmatprep.subr.bf16.mxu0 0
      %1333 = vmatpush2.bf16.msra.mxu0 0
      %1334 = vmatprep.subr.bf16.mxu0 0
      %1335 = vmatpush2.bf16.msra.mxu0 0
      %1336 = vmatprep.subr.bf16.mxu0 0
      %1337 = vmatpush2.bf16.msra.mxu0 0
      %1338 = vmatprep.subr.bf16.mxu0 0
      %1339 = vmatpush2.bf16.msra.mxu0 0
      %1340 = vmatprep.subr.bf16.mxu0 0
      %1341 = vmatpush2.bf16.msra.mxu0 0
      %1342 = vmatprep.subr.bf16.mxu0 0
      %1343 = vmatpush2.bf16.msra.mxu0 0
      %1344 = vmatprep.subr.bf16.mxu0 0
      %1345 = vmatpush2.bf16.msra.mxu0 0
      %1346 = vmatprep.mubr.bf16.mxu0 0
      %1347 = vmatmul.mubr.bf16.gmra.mxu0 %v598
      %v1348 = vpop.f32.mrf.mxu0
      %v1349 = vadd.f32 0.0, %v1348
      %v1350 = vpop.f32.mrf.mxu0
      %v1351 = vpop.f32.mrf.mxu0
      %v1352 = vadd.f32 0.0, %v1351
      %v1353 = vpop.f32.mrf.mxu0
      %1354 = vmatprep.mubr.bf16.mxu0 0
      %1355 = vmatmul.mubr.bf16.gmra.mxu0 %v601
      %v1356 = vpop.f32.mrf.mxu0
      %v1357 = vadd.f32 0.0, %v1356
      %v1358 = vpop.f32.mrf.mxu0
      %v1359 = vpop.f32.mrf.mxu0
      %v1360 = vadd.f32 0.0, %v1359
      %v1361 = vpop.f32.mrf.mxu0
      %1362 = vmatprep.mubr.bf16.mxu0 0
      %1363 = vmatmul.mubr.bf16.gmra.mxu0 %v604
      %v1364 = vpop.f32.mrf.mxu0
      %v1365 = vadd.f32 0.0, %v1364
      %v1366 = vpop.f32.mrf.mxu0
      %v1367 = vpop.f32.mrf.mxu0
      %v1368 = vadd.f32 0.0, %v1367
      %v1369 = vpop.f32.mrf.mxu0
      %1370 = vmatprep.mubr.bf16.mxu0 0
      %1371 = vmatmul.mubr.bf16.gmra.mxu0 %v1309
      %v1372 = vpop.f32.mrf.mxu0
      %v1373 = vadd.f32 0.0, %v1372
      %v1374 = vpop.f32.mrf.mxu0
      %v1375 = vpop.f32.mrf.mxu0
      %v1376 = vadd.f32 0.0, %v1375
      %v1377 = vpop.f32.mrf.mxu0
      %1378 = vdwg.mxu0
      %v1379 = vadd.f32 %v1279, %v1349
      %v1380 = vadd.f32 %v1280, %v1352
      %v1381 = vadd.f32 %v1281, %v1357
      %v1382 = vadd.f32 %v1282, %v1360
      %v1383 = vadd.f32 %v1283, %v1365
      %v1384 = vadd.f32 %v1284, %v1368
      %v1385 = vadd.f32 %v1285, %v1373
      %v1386 = vadd.f32 %v1286, %v1376
      %v1387 = vrot.slane %v1288, 5
      %v1388 = vrot.slane %v1387, 4
      %v1389 = vrot.slane %v1289, 5
      %v1390 = vsel %vm761, %v1388, %v1389
      %s1391 = scalar_lea.vmem %s3, 32
      %v1392 = vld [vmem:[%s1391] sm:$0xf]
      %v1393 = vunpack.c.l.b16 %v1390
      %v1394 = vpack.c.b16 %v1393, %v1110
      %v1396 = vsel %vm593, %v1394, 0
      %v1399 = vsel %vm606, %v1392, 0
      %1401 = vmatprep.subr.bf16.mxu0 0
      %1402 = vmatpush1.bf16.msra.mxu0 0
      %1403 = vmatprep.subr.bf16.mxu0 0
      %1404 = vmatpush1.bf16.msra.mxu0 0
      %1405 = vmatprep.subr.bf16.mxu0 0
      %1406 = vmatpush1.bf16.msra.mxu0 0
      %1407 = vmatprep.subr.bf16.mxu0 0
      %1408 = vmatpush1.bf16.msra.mxu0 0
      %1409 = vmatprep.subr.bf16.mxu0 0
      %1410 = vmatpush1.bf16.msra.mxu0 0
      %1411 = vmatprep.subr.bf16.mxu0 0
      %1412 = vmatpush1.bf16.msra.mxu0 0
      %1413 = vmatprep.subr.bf16.mxu0 0
      %1414 = vmatpush1.bf16.msra.mxu0 0
      %1415 = vmatprep.subr.bf16.mxu0 0
      %1416 = vmatpush1.bf16.msra.mxu0 %v1399
      %1417 = vmatprep.subr.bf16.mxu0 0
      %1418 = vmatpush2.bf16.msra.mxu0 0
      %1419 = vmatprep.subr.bf16.mxu0 0
      %1420 = vmatpush2.bf16.msra.mxu0 0
      %1421 = vmatprep.subr.bf16.mxu0 0
      %1422 = vmatpush2.bf16.msra.mxu0 0
      %1423 = vmatprep.subr.bf16.mxu0 0
      %1424 = vmatpush2.bf16.msra.mxu0 0
      %1425 = vmatprep.subr.bf16.mxu0 0
      %1426 = vmatpush2.bf16.msra.mxu0 0
      %1427 = vmatprep.subr.bf16.mxu0 0
      %1428 = vmatpush2.bf16.msra.mxu0 0
      %1429 = vmatprep.subr.bf16.mxu0 0
      %1430 = vmatpush2.bf16.msra.mxu0 0
      %1431 = vmatprep.subr.bf16.mxu0 0
      %1432 = vmatpush2.bf16.msra.mxu0 0
      %1433 = vmatprep.mubr.bf16.mxu0 0
      %1434 = vmatmul.mubr.bf16.gmra.mxu0 %v812
      %v1435 = vpop.f32.mrf.mxu0
      %v1436 = vadd.f32 0.0, %v1435
      %v1437 = vpop.f32.mrf.mxu0
      %v1438 = vpop.f32.mrf.mxu0
      %v1439 = vadd.f32 0.0, %v1438
      %v1440 = vpop.f32.mrf.mxu0
      %1441 = vmatprep.mubr.bf16.mxu0 0
      %1442 = vmatmul.mubr.bf16.gmra.mxu0 %v815
      %v1443 = vpop.f32.mrf.mxu0
      %v1444 = vadd.f32 0.0, %v1443
      %v1445 = vpop.f32.mrf.mxu0
      %v1446 = vpop.f32.mrf.mxu0
      %v1447 = vadd.f32 0.0, %v1446
      %v1448 = vpop.f32.mrf.mxu0
      %1449 = vmatprep.mubr.bf16.mxu0 0
      %1450 = vmatmul.mubr.bf16.gmra.mxu0 %v818
      %v1451 = vpop.f32.mrf.mxu0
      %v1452 = vadd.f32 0.0, %v1451
      %v1453 = vpop.f32.mrf.mxu0
      %v1454 = vpop.f32.mrf.mxu0
      %v1455 = vadd.f32 0.0, %v1454
      %v1456 = vpop.f32.mrf.mxu0
      %1457 = vmatprep.mubr.bf16.mxu0 0
      %1458 = vmatmul.mubr.bf16.gmra.mxu0 %v1396
      %v1459 = vpop.f32.mrf.mxu0
      %v1460 = vadd.f32 0.0, %v1459
      %v1461 = vpop.f32.mrf.mxu0
      %v1462 = vpop.f32.mrf.mxu0
      %v1463 = vadd.f32 0.0, %v1462
      %v1464 = vpop.f32.mrf.mxu0
      %1465 = vdwg.mxu0
      %v1466 = vadd.f32 %v1379, %v1436
      %v1467 = vadd.f32 %v1380, %v1439
      %v1468 = vadd.f32 %v1381, %v1444
      %v1469 = vadd.f32 %v1382, %v1447
      %v1470 = vadd.f32 %v1383, %v1452
      %v1471 = vadd.f32 %v1384, %v1455
      %v1472 = vadd.f32 %v1385, %v1460
      %v1473 = vadd.f32 %v1386, %v1463
      %v1474 = vld [vmem:[%s4] sm:$0x1]
      %v1476 = vlaneseq
      %v1477 = vshrl.u32 %v1476, 7
      %v1478 = vsub.s32 0, %v1477
      %v1479 = vrot.slane %v1474, %v1478
      %v1481 = vadd.f32 %v1466, %v1479
      %v1482 = vadd.f32 %v1467, %v1479
      %v1483 = vadd.f32 %v1468, %v1479
      %v1484 = vadd.f32 %v1469, %v1479
      %v1485 = vadd.f32 %v1470, %v1479
      %v1486 = vadd.f32 %v1471, %v1479
      %v1487 = vadd.f32 %v1472, %v1479
      %v1488 = vadd.f32 %v1473, %v1479
      %v1489 = vpack.c.bf16 %v1482, %v1481
      %v1490 = vpack.c.bf16 %v1484, %v1483
      %v1491 = vpack.c.bf16 %v1486, %v1485
      %v1492 = vpack.c.bf16 %v1488, %v1487
      %v1497 = vunpack.c.l.b16 %v1489
      %v1498 = vunpack.c.h.b16 %v1489
      %v1499 = vunpack.c.l.b16 %v1490
      %v1500 = vunpack.c.h.b16 %v1490
      %v1501 = vunpack.c.l.b16 %v1491
      %v1502 = vunpack.c.h.b16 %v1491
      %v1503 = vunpack.c.l.b16 %v1492
      %v1504 = vunpack.c.h.b16 %v1492
      %v1505 = vpack.c.b16 %v1497, %v1497
      %v1506 = vpack.c.b16 %v1498, %v1498
      %v1507 = vpack.c.b16 %v1499, %v1499
      %v1508 = vpack.c.b16 %v1500, %v1500
      %v1509 = vpack.c.b16 %v1501, %v1501
      %v1510 = vpack.c.b16 %v1502, %v1502
      %v1511 = vpack.c.b16 %v1503, %v1503
      %v1512 = vpack.c.b16 %v1504, %v1504
      %vm1521 = vcmask 60416
      %1522 = vst.msk [vmem:[%s258] sm:$0xf] %vm1521, %v1505
      %1523 = vst.msk [vmem:[%s258 + $0x4] sm:$0xf] %vm1521, %v1506
      %1524 = vst.msk [vmem:[%s258 + $0x8] sm:$0xf] %vm1521, %v1507
      %1525 = vst.msk [vmem:[%s258 + $0xc] sm:$0xf] %vm1521, %v1508
      %1526 = vst.msk [vmem:[%s258 + $0x10] sm:$0xf] %vm1521, %v1509
      %1527 = vst.msk [vmem:[%s258 + $0x14] sm:$0xf] %vm1521, %v1510
      %1528 = vst.msk [vmem:[%s258 + $0x18] sm:$0xf] %vm1521, %v1511
      %1529 = vst.msk [vmem:[%s258 + $0x1c] sm:$0xf] %vm1521, %v1512
      %v1530 = vunpack.c.l.bf16 %v1489
      %v1531 = vunpack.c.h.bf16 %v1489
      %v1532 = vunpack.c.l.bf16 %v1490
      %v1533 = vunpack.c.h.bf16 %v1490
      %v1534 = vunpack.c.l.bf16 %v1491
      %v1535 = vunpack.c.h.bf16 %v1491
      %v1536 = vunpack.c.l.bf16 %v1492
      %v1537 = vunpack.c.h.bf16 %v1492
      %v1538 = vsel %vm593, %v1530, 0.0
      %v1539 = vsel %vm593, %v1531, 0.0
      %v1540 = vadd.f32 %v1538, %v1539
      %v1541 = vsel %vm593, %v1532, 0.0
      %v1542 = vadd.f32 %v1540, %v1541
      %v1543 = vsel %vm593, %v1533, 0.0
      %v1544 = vadd.f32 %v1542, %v1543
      %v1545 = vsel %vm593, %v1534, 0.0
      %v1546 = vadd.f32 %v1544, %v1545
      %v1547 = vsel %vm593, %v1535, 0.0
      %v1548 = vadd.f32 %v1546, %v1547
      %v1549 = vsel %vm593, %v1536, 0.0
      %v1550 = vadd.f32 %v1548, %v1549
      %v1551 = vsel %vm593, %v1537, 0.0
      %v1552 = vadd.f32 %v1550, %v1551
      %v1553 = vrot.slane %v1552, 4
      %v1554 = vadd.f32 %v1552, %v1553
      %v1555 = vrot.slane %v1554, 2
      %v1556 = vadd.f32 %v1554, %v1555
      %v1557 = vrot.slane %v1556, 1
      %v1558 = vadd.f32 %v1556, %v1557
      %v1559 = vmul.f32 %v1530, %v1530
      %v1560 = vmul.f32 %v1531, %v1531
      %v1561 = vmul.f32 %v1532, %v1532
      %v1562 = vmul.f32 %v1533, %v1533
      %v1563 = vmul.f32 %v1534, %v1534
      %v1564 = vmul.f32 %v1535, %v1535
      %v1565 = vmul.f32 %v1536, %v1536
      %v1566 = vmul.f32 %v1537, %v1537
      %v1567 = vsel %vm593, %v1559, 0.0
      %v1568 = vsel %vm593, %v1560, 0.0
      %v1569 = vadd.f32 %v1567, %v1568
      %v1570 = vsel %vm593, %v1561, 0.0
      %v1571 = vadd.f32 %v1569, %v1570
      %v1572 = vsel %vm593, %v1562, 0.0
      %v1573 = vadd.f32 %v1571, %v1572
      %v1574 = vsel %vm593, %v1563, 0.0
      %v1575 = vadd.f32 %v1573, %v1574
      %v1576 = vsel %vm593, %v1564, 0.0
      %v1577 = vadd.f32 %v1575, %v1576
      %v1578 = vsel %vm593, %v1565, 0.0
      %v1579 = vadd.f32 %v1577, %v1578
      %v1580 = vsel %vm593, %v1566, 0.0
      %v1581 = vadd.f32 %v1579, %v1580
      %v1582 = vrot.slane %v1581, 4
      %v1583 = vadd.f32 %v1581, %v1582
      %v1584 = vrot.slane %v1583, 2
      %v1585 = vadd.f32 %v1583, %v1584
      %v1586 = vrot.slane %v1585, 1
      %v1587 = vadd.f32 %v1585, %v1586
      %vm1588 = vcmp.eq.s32.totalorder %v379, 0
      %v1589 = vsel %vm1588, %v1558, %v1587
      %1590 = vst.msk [vmem:[%s262] sm:$0xff] %vm593, %v1589
      %p1591 = scmp.lt.s32.totalorder %s18, 1
      %s1592 = scalar_select %p1591, %s18, 1
      %s1593 = smul.addr %s1592, 8
      %s1594 = smul.addr %s1593, 4
      %s1595 = scalar_lea.vmem %s5, %s1594
      %p1596 = scmp.lt.s32.totalorder %s18, 1
      %s1597 = scalar_select %p1596, %s18, 1
      %s1598 = smul.addr %s1597, 8
      %s1599 = scalar_lea.vmem %s6, %s1598
      // Predicated region
      $region41: #{_downblock_forward_impl.4} parent=39 // pred_check
        %p1600 = pneg %p146
      $region42: #{_downblock_forward_impl.4} parent=39 // pred_check_branch
        %1602 = sbr.rel (%p1600) target = $region44
      $region43: #{_downblock_forward_impl.4} parent=39 // pred_region
        _
      $region44: #{_downblock_forward_impl.4} parent=39 // pred_fallthru
        _
      // Predicated region
      $region45: #{_downblock_forward_impl.4} parent=39 // pred_check
        %p1603 = pneg %p172
      $region46: #{_downblock_forward_impl.4} parent=39 // pred_check_branch
        %1605 = sbr.rel (%p1603) target = $region48
      $region47: #{_downblock_forward_impl.4} parent=39 // pred_region
        _
      $region48: #{_downblock_forward_impl.4} parent=39 // pred_fallthru
        _
    $region40: #{_downblock_forward_impl.4} parent=5 // pred_fallthru
      _
    %p1606 = scmp.le.s32.totalorder 2, %s13
    // Predicated region
    $region49: #{_downblock_forward_impl.4} parent=5 // pred_check
      %p1607 = pneg %p1606
    $region50: #{_downblock_forward_impl.4} parent=5 // pred_check_branch
      %1609 = sbr.rel (%p1607) target = $region52
    $region51: #{_downblock_forward_impl.4} parent=5 // pred_region
      %s1610 = ssub.s32 %s13, 2
      // Predicated region
      $region53: #{_downblock_forward_impl.4} parent=51 // pred_check
        %p1611 = pneg %p152
      $region54: #{_downblock_forward_impl.4} parent=51 // pred_check_branch
        %1613 = sbr.rel (%p1611) target = $region56
      $region55: #{_downblock_forward_impl.4} parent=51 // pred_region
        %p1614 = scmp.lt.s32.totalorder %s19, 1
        %s1615 = scalar_select %p1614, %s19, 1
        %s1616 = smul.addr %s1615, 8
        %s1617 = smul.addr %s1616, 4
        %s1618 = scalar_lea.vmem %s5, %s1617
      $region56: #{_downblock_forward_impl.4} parent=51 // pred_fallthru
        _
      // Predicated region
      $region57: #{_downblock_forward_impl.4} parent=51 // pred_check
        %p1619 = pneg %p178
      $region58: #{_downblock_forward_impl.4} parent=51 // pred_check_branch
        %1621 = sbr.rel (%p1619) target = $region60
      $region59: #{_downblock_forward_impl.4} parent=51 // pred_region
        %p1622 = scmp.lt.s32.totalorder %s19, 1
        %s1623 = scalar_select %p1622, %s19, 1
        %s1624 = smul.addr %s1623, 8
        %s1625 = scalar_lea.vmem %s6, %s1624
      $region60: #{_downblock_forward_impl.4} parent=51 // pred_fallthru
        _
    $region52: #{_downblock_forward_impl.4} parent=5 // pred_fallthru
      _
  $region6: #{_downblock_forward_impl.4} parent=0 // loop_footer
    %s17 = sadd.s32 1, %s13
  $region7: #{_downblock_forward_impl.4} parent=0 // loop_footer_branch
    %12 = sbr.rel target = $region3
  $region8: #{_downblock_forward_impl.4} parent=0 // loop_exit
    _

</llo_original>
